<compile_context>
chip_gen: v6e
topology: v6e:2x2x1
jax: 0.10.0
libtpu: 0.0.40
codegen_flags: <defaults>
</compile_context>

<pallas_src>
import math

import jax
import jax.numpy as jnp
from jax.experimental import pallas as pl
from jax.experimental.pallas import tpu as pltpu


def _round_up(x: int, m: int) -> int:
    return (x + m - 1) // m * m


def mlp_kernel(x_ref, w1_ref, b1_ref, w2_ref, b2_ref, o_ref):
    # x_ref : (TM, 784) bf16      w1_ref: (784, D_h_p) bf16   b1_ref: (1, D_h_p) f32
    # w2_ref: (D_h_p, D_out_p) bf16  b2_ref: (1, D_out_p) f32  o_ref: (TM, D_out_p) f32
    h = jnp.dot(x_ref[...], w1_ref[...], preferred_element_type=jnp.float32)
    h = jnp.maximum(h + b1_ref[...], 0.0)                 # fused bias + ReLU (VPU, f32)
    y = jnp.dot(h.astype(w2_ref.dtype), w2_ref[...],
                preferred_element_type=jnp.float32)
    o_ref[...] = (y + b2_ref[...]).astype(o_ref.dtype)


def prepare_params(w1, b1, w2, b2, *, weight_dtype=jnp.bfloat16):
    """One-time conversion from PyTorch parameter layout to the kernel layout.

    PyTorch: w1 (hidden, in), b1 (hidden,), w2 (out, hidden), b2 (out,)
    Kernel : pre-transposed bf16 weights, output-feature dims zero-padded to
             128-lane multiples. The first contraction dim (784) is kept
             unpadded so x needs no per-call padding copy.
    """
    d_hidden, d_in = w1.shape
    d_out = w2.shape[0]
    d_h_p = _round_up(d_hidden, 128)
    d_out_p = _round_up(d_out, 128)

    w1_t = (jnp.zeros((d_in, d_h_p), weight_dtype)
            .at[:, :d_hidden].set(w1.T.astype(weight_dtype)))
    b1_p = jnp.zeros((1, d_h_p), jnp.float32).at[0, :d_hidden].set(
        b1.astype(jnp.float32))
    w2_t = (jnp.zeros((d_h_p, d_out_p), weight_dtype)
            .at[:d_hidden, :d_out].set(w2.T.astype(weight_dtype)))
    b2_p = jnp.zeros((1, d_out_p), jnp.float32).at[0, :d_out].set(
        b2.astype(jnp.float32))
    return (w1_t, b1_p, w2_t, b2_p), (d_in, d_hidden, d_out)


def _default_tile_m(batch: int) -> int:
    """Per-device batch-tile heuristic (v5e: 128, v6e/v7x: 256), keeping
    at least 2 grid steps so v7x's two TensorCores both get work."""
    try:
        kind = jax.devices()[0].device_kind.lower()
    except Exception:  # pragma: no cover - defensive
        kind = ""
    if "v5" in kind:
        tm = 128 if batch < 1024 else 256
    else:
        tm = 256
    while tm > 128 and batch <= tm:
        tm //= 2
    return tm


def neuralnet_forward(x, packed_params, dims, *, tm=None):
    """y = relu(x @ W1.T + b1) @ W2.T + b2   (nn.Linear -> ReLU -> nn.Linear)."""
    w1_t, b1_p, w2_t, b2_p = packed_params
    d_in, _, d_out = dims
    B = x.shape[0]
    assert x.shape[1] == d_in
    d_h_p = w1_t.shape[1]
    d_out_p = w2_t.shape[1]

    if tm is None:
        tm = _default_tile_m(B)

    # bf16 operand for the streamed input: halves DMA bytes, native MXU rate.
    x_in = x.astype(w1_t.dtype)

    grid = (pl.cdiv(B, tm),)

    flops = 2 * B * (d_in * d_h_p + d_h_p * d_out_p)
    bytes_accessed = (
        x_in.size * x_in.dtype.itemsize
        + w1_t.size * w1_t.dtype.itemsize
        + w2_t.size * w2_t.dtype.itemsize
        + b1_p.size * b1_p.dtype.itemsize
        + b2_p.size * b2_p.dtype.itemsize
        + B * d_out_p * 4
    )
    cost = pl.CostEstimate(flops=flops, transcendentals=0,
                           bytes_accessed=bytes_accessed)

    y_p = pl.pallas_call(
        mlp_kernel,
        out_shape=jax.ShapeDtypeStruct((B, d_out_p), jnp.float32),
        grid=grid,
        in_specs=[
            pl.BlockSpec((tm, d_in), lambda i: (i, 0)),        # x tile (pipelined)
            pl.BlockSpec((d_in, d_h_p), lambda i: (0, 0)),     # W1 resident
            pl.BlockSpec((1, d_h_p), lambda i: (0, 0)),        # b1 resident
            pl.BlockSpec((d_h_p, d_out_p), lambda i: (0, 0)),  # W2 resident
            pl.BlockSpec((1, d_out_p), lambda i: (0, 0)),      # b2 resident
        ],
        out_specs=pl.BlockSpec((tm, d_out_p), lambda i: (i, 0)),
        compiler_params=pltpu.CompilerParams(
            dimension_semantics=("parallel",),  # batch axis -> megacore-shardable
        ),
        cost_estimate=cost,
    )(x_in, w1_t, b1_p, w2_t, b2_p)

    return y_p[:, :d_out]


if __name__ == "__main__":
    # Shapes from the module spec: Linear(784, 500) -> ReLU -> Linear(500, 10)
    input_size, hidden_size, num_classes = 784, 500, 10
    batch = 256  # small demo batch; tm heuristic keeps >= 2 grid steps

    key = jax.random.PRNGKey(0)
    kx, kw1, kb1, kw2, kb2 = jax.random.split(key, 5)

    # PyTorch nn.Linear default init: U(-1/sqrt(fan_in), 1/sqrt(fan_in))
    bound1 = 1.0 / math.sqrt(input_size)
    w1 = jax.random.uniform(kw1, (hidden_size, input_size), jnp.float32,
                            minval=-bound1, maxval=bound1)
    b1 = jax.random.uniform(kb1, (hidden_size,), jnp.float32,
                            minval=-bound1, maxval=bound1)
    bound2 = 1.0 / math.sqrt(hidden_size)
    w2 = jax.random.uniform(kw2, (num_classes, hidden_size), jnp.float32,
                            minval=-bound2, maxval=bound2)
    b2 = jax.random.uniform(kb2, (num_classes,), jnp.float32,
                            minval=-bound2, maxval=bound2)

    x = jax.random.normal(kx, (batch, input_size), dtype=jnp.float32)

    # One-time parameter packing (transpose + lane padding + bf16), at "init".
    packed, dims = prepare_params(w1, b1, w2, b2)

    y = neuralnet_forward(x, packed, dims)
    jax.block_until_ready(y)
    assert y.shape == (batch, num_classes)

    # Reference matching the kernel's precision (bf16 operands, f32 accum).
    xb = x.astype(jnp.bfloat16)
    w1b = w1.astype(jnp.bfloat16)
    w2b = w2.astype(jnp.bfloat16)
    h_ref = jnp.maximum(
        jnp.dot(xb, w1b.T, preferred_element_type=jnp.float32) + b1, 0.0)
    y_ref = jnp.dot(h_ref.astype(jnp.bfloat16), w2b.T,
                    preferred_element_type=jnp.float32) + b2
    assert jnp.allclose(y, y_ref, atol=1e-3, rtol=1e-3), (
        float(jnp.max(jnp.abs(y - y_ref))))

    # Sanity check vs. the pure-f32 PyTorch-equivalent forward (loose bf16 tol).
    y_f32 = jnp.maximum(x @ w1.T + b1, 0.0) @ w2.T + b2
    assert jnp.allclose(y, y_f32, atol=5e-2, rtol=5e-2), (
        float(jnp.max(jnp.abs(y - y_f32))))

    print("KERNEL_OK")
</pallas_src>

<mosaic_0001>
module attributes {stable_mosaic.version = 11 : i64} {
  func.func @mlp_kernel(%arg0: i32, %arg1: memref<128x784xbf16, #tpu.memory_space<vmem>>, %arg2: memref<784x512xbf16, #tpu.memory_space<vmem>>, %arg3: memref<1x512xf32, #tpu.memory_space<vmem>>, %arg4: memref<512x128xbf16, #tpu.memory_space<vmem>>, %arg5: memref<1x128xf32, #tpu.memory_space<vmem>>, %arg6: memref<128x128xf32, #tpu.memory_space<vmem>>) attributes {dimension_semantics = [#tpu.dimension_semantics<parallel>], iteration_bounds = array<i64: 2>, scalar_prefetch = 0 : i64, scratch_operands = 0 : i64, tpu.core_type = #tpu.core_type<tc>, window_params = [{transform_indices = @transform_0, window_bounds = array<i64: 128, 784>}, {pipeline_mode = #tpu.pipeline_mode<synchronous>, transform_indices = @transform_1, window_bounds = array<i64: 784, 512>}, {pipeline_mode = #tpu.pipeline_mode<synchronous>, transform_indices = @transform_2, window_bounds = array<i64: 1, 512>}, {pipeline_mode = #tpu.pipeline_mode<synchronous>, transform_indices = @transform_3, window_bounds = array<i64: 512, 128>}, {pipeline_mode = #tpu.pipeline_mode<synchronous>, transform_indices = @transform_4, window_bounds = array<i64: 1, 128>}, {transform_indices = @transform_5, window_bounds = array<i64: 128, 128>}]} {
    %c0 = arith.constant 0 : index
    %c0_0 = arith.constant 0 : index
    %0 = vector.load %arg1[%c0, %c0_0] : memref<128x784xbf16, #tpu.memory_space<vmem>>, vector<128x784xbf16>
    %c0_1 = arith.constant 0 : index
    %c0_2 = arith.constant 0 : index
    %1 = vector.load %arg2[%c0_1, %c0_2] : memref<784x512xbf16, #tpu.memory_space<vmem>>, vector<784x512xbf16>
    %cst = arith.constant dense<0.000000e+00> : vector<128x512xf32>
    %2 = tpu.matmul %0, %1, %cst {dimension_numbers = #tpu.dot_dimension_numbers<[1], [0], [0], [1], [0, 0, 1, 1], [], []>} : vector<128x784xbf16>, vector<784x512xbf16>, vector<128x512xf32> -> vector<128x512xf32>
    %c0_3 = arith.constant 0 : index
    %c0_4 = arith.constant 0 : index
    %3 = vector.load %arg3[%c0_3, %c0_4] : memref<1x512xf32, #tpu.memory_space<vmem>>, vector<1x512xf32>
    %4 = vector.broadcast %3 : vector<1x512xf32> to vector<128x512xf32>
    %5 = arith.addf %2, %4 : vector<128x512xf32>
    %cst_5 = arith.constant 0.000000e+00 : f32
    %6 = vector.broadcast %cst_5 : f32 to vector<128x512xf32>
    %7 = arith.maximumf %5, %6 : vector<128x512xf32>
    %8 = arith.truncf %7 : vector<128x512xf32> to vector<128x512xbf16>
    %c0_6 = arith.constant 0 : index
    %c0_7 = arith.constant 0 : index
    %9 = vector.load %arg4[%c0_6, %c0_7] : memref<512x128xbf16, #tpu.memory_space<vmem>>, vector<512x128xbf16>
    %cst_8 = arith.constant dense<0.000000e+00> : vector<128x128xf32>
    %10 = tpu.matmul %8, %9, %cst_8 {dimension_numbers = #tpu.dot_dimension_numbers<[1], [0], [0], [1], [0, 0, 1, 1], [], []>} : vector<128x512xbf16>, vector<512x128xbf16>, vector<128x128xf32> -> vector<128x128xf32>
    %c0_9 = arith.constant 0 : index
    %c0_10 = arith.constant 0 : index
    %11 = vector.load %arg5[%c0_9, %c0_10] : memref<1x128xf32, #tpu.memory_space<vmem>>, vector<1x128xf32>
    %12 = vector.broadcast %11 : vector<1x128xf32> to vector<128x128xf32>
    %13 = arith.addf %10, %12 : vector<128x128xf32>
    %c0_11 = arith.constant 0 : index
    %c0_12 = arith.constant 0 : index
    %14 = vector.load %arg6[%c0_11, %c0_12] : memref<128x128xf32, #tpu.memory_space<vmem>>, vector<128x128xf32>
    tpu.vector_store %arg6[%c0_11, %c0_12], %13 {strides = array<i32>} : memref<128x128xf32, #tpu.memory_space<vmem>>, vector<128x128xf32>,
    return
  }
  func.func @transform_0(%arg0: i32) -> (i32, i32) {
    %c0_i32 = arith.constant 0 : i32
    %c0_i32_0 = arith.constant 0 : i32
    return %arg0, %c0_i32 : i32, i32
  }
  func.func @transform_1(%arg0: i32) -> (i32, i32) {
    %c0_i32 = arith.constant 0 : i32
    %c0_i32_0 = arith.constant 0 : i32
    %c0_i32_1 = arith.constant 0 : i32
    return %c0_i32, %c0_i32_0 : i32, i32
  }
  func.func @transform_2(%arg0: i32) -> (i32, i32) {
    %c0_i32 = arith.constant 0 : i32
    %c0_i32_0 = arith.constant 0 : i32
    %c0_i32_1 = arith.constant 0 : i32
    return %c0_i32, %c0_i32_0 : i32, i32
  }
  func.func @transform_3(%arg0: i32) -> (i32, i32) {
    %c0_i32 = arith.constant 0 : i32
    %c0_i32_0 = arith.constant 0 : i32
    %c0_i32_1 = arith.constant 0 : i32
    return %c0_i32, %c0_i32_0 : i32, i32
  }
  func.func @transform_4(%arg0: i32) -> (i32, i32) {
    %c0_i32 = arith.constant 0 : i32
    %c0_i32_0 = arith.constant 0 : i32
    %c0_i32_1 = arith.constant 0 : i32
    return %c0_i32, %c0_i32_0 : i32, i32
  }
  func.func @transform_5(%arg0: i32) -> (i32, i32) {
    %c0_i32 = arith.constant 0 : i32
    %c0_i32_0 = arith.constant 0 : i32
    return %arg0, %c0_i32 : i32, i32
  }
}

</mosaic_0001>

<llo_original>
// kernel: tpu_custom_call.1
$region0: #{tpu_custom_call.1}
  #allocation0 [shape = 'u32[]', space=smem, size = 0x4, offset = 0x4, fixed_abs, tag = 'smem constant byte address 0x4 - core index']
  #allocation1 [shape = 'u32[144,128]{1,0:T(1,128)}', space=vmem, size = 0x12000, scoped, tag = 'internal scratch']
  %s0 = inlined_call_operand.vmem [shape: bf16[256,784], index: 0, kind: input, shape index: {}]
  %s1 = inlined_call_operand.vmem [shape: bf16[784,512], index: 1, kind: input, shape index: {}]
  %s2 = inlined_call_operand.vmem [shape: f32[1,512], index: 2, kind: input, shape index: {}]
  %s3 = inlined_call_operand.hbm [shape: bf16[512,128], index: 3, kind: input, shape index: {}]
  %s4 = inlined_call_operand.vmem [shape: f32[1,128], index: 4, kind: input, shape index: {}]
  %s5 = inlined_call_operand.hbm [shape: f32[256,128], index: 5, kind: output, shape index: {}]
  %s6 = sld [smem:[#allocation0]]
  $region57: #{tpu_custom_call.1} parent=0
    _
  %s8 = ssub.s32 1, %s6
  %s9 = scalar_select 0, %s8, %s6
  $region1: #{tpu_custom_call.1} parent=0
    #allocation2 [shape = 'u8[131072]{0}', space=vmem, size = 0x20000, scoped, tag = 'input window, operand 3, single buffered']
    #allocation3 [shape = 's32[2]{0}', space=sflag, size = 0x8, scoped, tag = 'scoped memory for tpu_custom_call.1']
    #allocation4 [shape = 's32[2]{0}', space=sflag, size = 0x8, scoped, tag = 'scoped memory for tpu_custom_call.1']
    #allocation5 [shape = 'u8[131072]{0}', space=vmem, size = 0x20000, scoped, tag = 'output window, operand 0']
    %10 = vsyncpa [#allocation3], 0
    %11 = vsyncpa [#allocation4], 0
    %s12 = scalar_lea.sflag [#allocation4], 1
    %13 = vsyncpa %s12, 0
    loop: start=0, step=1, limit=4
    $region2: #{tpu_custom_call.1} parent=1 // loop_pre_header
      _
    $region3: #{tpu_custom_call.1} parent=1 // loop_header
      %s15 = sphi 0, %s19
      %p16 = scmp.ge.s32.totalorder %s15, 4
      %s25 = sphi 0, %s27
      %s28 = sphi 0, %s25
      %s29 = sphi 0, %s28
      %s45 = sphi 0, %s29
      %s49 = sphi 0, %s49
      %s51 = sphi 0, %s49
      %s52 = sphi 0, %s51
      %s66 = sphi 0, %s52
      %s70 = sphi 0, %s70
      %s72 = sphi 0, %s70
      %s73 = sphi 0, %s72
      %s87 = sphi 0, %s73
      %s91 = sphi 0, %s91
      %s93 = sphi 0, %s91
      %s94 = sphi 0, %s93
      %s108 = sphi 0, %s94
      %s112 = sphi 0, %s112
      %s114 = sphi 0, %s112
      %s115 = sphi 0, %s114
      %s129 = sphi 0, %s115
      %s135 = sphi 0, %s137
      %s138 = sphi 0, %s135
      %s139 = sphi 0, %s138
      %s155 = sphi 0, %s139
    $region4: #{tpu_custom_call.1} parent=1 // loop_header_branch
      %18 = sbr.rel (%p16) target = $region8
    $region5: #{tpu_custom_call.1} parent=1 // loop_body
      %s20 = ssub.s32 %s15, 1
      %s21 = ssub.s32 %s15, 2
      %s22 = sadd.s32 %s15, 1
      %s23 = ssub.s32 %s15, %s22
      %p24 = scmp.eq.s32.totalorder %s23, 0
      %s26 = sadd.s32 %s25, 1
      %s27 = scalar_select %p24, %s25, %s26
      %p30 = pneg %p24
      %p31 = scmp.eq.s32.totalorder %s15, 1
      %p32 = por %p30, %p31
      %p33 = scmp.ne.s32.totalorder %s25, %s28
      %p34 = scmp.eq.s32.totalorder %s15, 0
      %p35 = por %p33, %p34
      %p36 = scmp.ne.s32.totalorder %s25, %s28
      %p37 = scmp.eq.s32.totalorder %s20, 1
      %p38 = por %p36, %p37
      %p39 = scmp.ne.s32.totalorder %s28, %s29
      %p40 = scmp.eq.s32.totalorder %s20, 0
      %p41 = por %p39, %p40
      %p42 = scmp.ne.s32.totalorder %s28, %s29
      %p43 = scmp.eq.s32.totalorder %s21, 1
      %p44 = por %p42, %p43
      %p46 = scmp.ne.s32.totalorder %s29, %s45
      %p47 = scmp.eq.s32.totalorder %s21, 0
      %p48 = por %p46, %p47
      %s50 = sadd.s32 %s49, 1
      %p53 = scmp.eq.s32.totalorder %s15, 1
      %p54 = scmp.ne.s32.totalorder %s49, %s51
      %p55 = scmp.eq.s32.totalorder %s15, 0
      %p56 = por %p54, %p55
      %p57 = scmp.ne.s32.totalorder %s49, %s51
      %p58 = scmp.eq.s32.totalorder %s20, 1
      %p59 = por %p57, %p58
      %p60 = scmp.ne.s32.totalorder %s51, %s52
      %p61 = scmp.eq.s32.totalorder %s20, 0
      %p62 = por %p60, %p61
      %p63 = scmp.ne.s32.totalorder %s51, %s52
      %p64 = scmp.eq.s32.totalorder %s21, 1
      %p65 = por %p63, %p64
      %p67 = scmp.ne.s32.totalorder %s52, %s66
      %p68 = scmp.eq.s32.totalorder %s21, 0
      %p69 = por %p67, %p68
      %s71 = sadd.s32 %s70, 1
      %p74 = scmp.eq.s32.totalorder %s15, 1
      %p75 = scmp.ne.s32.totalorder %s70, %s72
      %p76 = scmp.eq.s32.totalorder %s15, 0
      %p77 = por %p75, %p76
      %p78 = scmp.ne.s32.totalorder %s70, %s72
      %p79 = scmp.eq.s32.totalorder %s20, 1
      %p80 = por %p78, %p79
      %p81 = scmp.ne.s32.totalorder %s72, %s73
      %p82 = scmp.eq.s32.totalorder %s20, 0
      %p83 = por %p81, %p82
      %p84 = scmp.ne.s32.totalorder %s72, %s73
      %p85 = scmp.eq.s32.totalorder %s21, 1
      %p86 = por %p84, %p85
      %p88 = scmp.ne.s32.totalorder %s73, %s87
      %p89 = scmp.eq.s32.totalorder %s21, 0
      %p90 = por %p88, %p89
      %s92 = sadd.s32 %s91, 1
      %p95 = scmp.eq.s32.totalorder %s15, 1
      %p96 = scmp.ne.s32.totalorder %s91, %s93
      %p97 = scmp.eq.s32.totalorder %s15, 0
      %p98 = por %p96, %p97
      %p99 = scmp.ne.s32.totalorder %s91, %s93
      %p100 = scmp.eq.s32.totalorder %s20, 1
      %p101 = por %p99, %p100
      %p102 = scmp.ne.s32.totalorder %s93, %s94
      %p103 = scmp.eq.s32.totalorder %s20, 0
      %p104 = por %p102, %p103
      %p105 = scmp.ne.s32.totalorder %s93, %s94
      %p106 = scmp.eq.s32.totalorder %s21, 1
      %p107 = por %p105, %p106
      %p109 = scmp.ne.s32.totalorder %s94, %s108
      %p110 = scmp.eq.s32.totalorder %s21, 0
      %p111 = por %p109, %p110
      %s113 = sadd.s32 %s112, 1
      %p116 = scmp.eq.s32.totalorder %s15, 1
      %p117 = scmp.ne.s32.totalorder %s112, %s114
      %p118 = scmp.eq.s32.totalorder %s15, 0
      %p119 = por %p117, %p118
      %p120 = scmp.ne.s32.totalorder %s112, %s114
      %p121 = scmp.eq.s32.totalorder %s20, 1
      %p122 = por %p120, %p121
      %p123 = scmp.ne.s32.totalorder %s114, %s115
      %p124 = scmp.eq.s32.totalorder %s20, 0
      %p125 = por %p123, %p124
      %p126 = scmp.ne.s32.totalorder %s114, %s115
      %p127 = scmp.eq.s32.totalorder %s21, 1
      %p128 = por %p126, %p127
      %p130 = scmp.ne.s32.totalorder %s115, %s129
      %p131 = scmp.eq.s32.totalorder %s21, 0
      %p132 = por %p130, %p131
      %s133 = ssub.s32 %s15, %s22
      %p134 = scmp.eq.s32.totalorder %s133, 0
      %s136 = sadd.s32 %s135, 1
      %s137 = scalar_select %p134, %s135, %s136
      %p140 = pneg %p134
      %p141 = scmp.eq.s32.totalorder %s15, 1
      %p142 = por %p140, %p141
      %p143 = scmp.ne.s32.totalorder %s135, %s138
      %p144 = scmp.eq.s32.totalorder %s15, 0
      %p145 = por %p143, %p144
      %p146 = scmp.ne.s32.totalorder %s135, %s138
      %p147 = scmp.eq.s32.totalorder %s20, 1
      %p148 = por %p146, %p147
      %p149 = scmp.ne.s32.totalorder %s138, %s139
      %p150 = scmp.eq.s32.totalorder %s20, 0
      %p151 = por %p149, %p150
      %p152 = scmp.ne.s32.totalorder %s138, %s139
      %p153 = scmp.eq.s32.totalorder %s21, 1
      %p154 = por %p152, %p153
      %p156 = scmp.ne.s32.totalorder %s139, %s155
      %p157 = scmp.eq.s32.totalorder %s21, 0
      %p158 = por %p156, %p157
      %p159 = scmp.le.s32.totalorder 1, %s15
      %p160 = scmp.lt.s32.totalorder %s15, 3
      %p161 = pnand %p159, %p160
      %p162 = pneg %p161
      // Predicated region
      $region9: #{tpu_custom_call.1} parent=5 // pred_check
        _
      $region10: #{tpu_custom_call.1} parent=5 // pred_check_branch
        %164 = sbr.rel (%p161) target = $region12
      $region11: #{tpu_custom_call.1} parent=5 // pred_region
        %s165 = ssub.s32 %s15, 1
        // Predicated region
        $region13: #{tpu_custom_call.1} parent=11 // pred_check
          %p166 = pneg %p62
        $region14: #{tpu_custom_call.1} parent=11 // pred_check_branch
          %168 = sbr.rel (%p166) target = $region16
        $region15: #{tpu_custom_call.1} parent=11 // pred_region
          _
        $region16: #{tpu_custom_call.1} parent=11 // pred_fallthru
          _
        // Predicated region
        $region17: #{tpu_custom_call.1} parent=11 // pred_check
          %p169 = pneg %p83
        $region18: #{tpu_custom_call.1} parent=11 // pred_check_branch
          %171 = sbr.rel (%p169) target = $region20
        $region19: #{tpu_custom_call.1} parent=11 // pred_region
          _
        $region20: #{tpu_custom_call.1} parent=11 // pred_fallthru
          _
        // Predicated region
        $region21: #{tpu_custom_call.1} parent=11 // pred_check
          %p172 = pneg %p104
        $region22: #{tpu_custom_call.1} parent=11 // pred_check_branch
          %174 = sbr.rel (%p172) target = $region24
        $region23: #{tpu_custom_call.1} parent=11 // pred_region
          %s176 = ssub.s32 4096, 4096
          %177 = vsyncadd [#allocation3], %s176
          %s178 = sshll.u32 [#allocation2], 4
          %s179 = int_to_ptr.vmem [resolvable:$true] %s178
          %184 = dma.hbm_to_vmem [thread:$0]  %s3, 4096, %s179, [#allocation3], 64, 64, 4
        $region24: #{tpu_custom_call.1} parent=11 // pred_fallthru
          _
        // Predicated region
        $region25: #{tpu_custom_call.1} parent=11 // pred_check
          %p185 = pneg %p125
        $region26: #{tpu_custom_call.1} parent=11 // pred_check_branch
          %187 = sbr.rel (%p185) target = $region28
        $region27: #{tpu_custom_call.1} parent=11 // pred_region
          _
        $region28: #{tpu_custom_call.1} parent=11 // pred_fallthru
          _
      $region12: #{tpu_custom_call.1} parent=5 // pred_fallthru
        _
      %p188 = scmp.lt.s32.totalorder %s15, 2
      // Predicated region
      $region29: #{tpu_custom_call.1} parent=5 // pred_check
        %p189 = pneg %p188
      $region30: #{tpu_custom_call.1} parent=5 // pred_check_branch
        %191 = sbr.rel (%p189) target = $region32
      $region31: #{tpu_custom_call.1} parent=5 // pred_region
        // Predicated region
        $region33: #{tpu_custom_call.1} parent=31 // pred_check
          %p192 = pneg %p35
        $region34: #{tpu_custom_call.1} parent=31 // pred_check_branch
          %194 = sbr.rel (%p192) target = $region36
        $region35: #{tpu_custom_call.1} parent=31 // pred_region
          %s195 = smul.u32 16, %s15
          %p196 = scmp.lt.s32.totalorder %s195, 31
          %s197 = scalar_select %p196, %s195, 31
          %s198 = smul.addr %s197, 7
          %s199 = smul.addr %s198, 4
          %s200 = scalar_lea.vmem %s0, %s199
          %s201 = smul.u32 16, %s15
        $region36: #{tpu_custom_call.1} parent=31 // pred_fallthru
          _
      $region32: #{tpu_custom_call.1} parent=5 // pred_fallthru
        _
      %p202 = scmp.le.s32.totalorder 1, %s15
      %p203 = scmp.lt.s32.totalorder %s15, 3
      %p204 = pnand %p202, %p203
      %p205 = pneg %p204
      // Predicated region
      $region37: #{tpu_custom_call.1} parent=5 // pred_check
        _
      $region38: #{tpu_custom_call.1} parent=5 // pred_check_branch
        %207 = sbr.rel (%p204) target = $region40
      $region39: #{tpu_custom_call.1} parent=5 // pred_region
        %s208 = ssub.s32 %s15, 1
        // Predicated region
        $region41: #{tpu_custom_call.1} parent=39 // pred_check
          %p209 = pneg %p104
        $region42: #{tpu_custom_call.1} parent=39 // pred_check_branch
          %211 = sbr.rel (%p209) target = $region44
        $region43: #{tpu_custom_call.1} parent=39 // pred_region
          %212 = dma.done [#allocation3], 4096
        $region44: #{tpu_custom_call.1} parent=39 // pred_fallthru
          _
        %s213 = smul.u32 16, %s20
        %p214 = scmp.lt.s32.totalorder %s213, 31
        %s215 = scalar_select %p214, %s213, 31
        %s216 = smul.addr %s215, 7
        %s217 = smul.addr %s216, 4
        %s218 = scalar_lea.vmem %s0, %s217
        %p219 = pneg %p41
        %p220 = pneg %p38
        %p221 = pneg %p62
        %p222 = pneg %p59
        %p223 = pneg %p83
        %p224 = pneg %p80
        %p225 = pneg %p104
        %p226 = pneg %p101
        %p227 = pneg %p125
        %p228 = pneg %p122
        %p229 = pneg %p151
        %p230 = pneg %p148
        %s231 = sand.u32 %s138, 1
        %s232 = scalar_lea.sflag [#allocation4], %s231
        %s233 = sand.u32 %s138, 1
        %s234 = smul.addr %s233, 128
        %s235 = scalar_lea.vmem [#allocation5], %s234
        %s236 = smul.u32 16, %s20
        %p237 = scmp.lt.s32.totalorder %s236, 31
        %s238 = scalar_select %p237, %s236, 31
        %s239 = smul.addr %s238, 7
        %s240 = smul.addr %s239, 4
        %s241 = scalar_lea.vmem %s0, %s240
        %s242 = smul.u32 16, %s20
        %s243 = smul.u32 16, %s20
        %v245 = vld [vmem:[%s241] sm:$0xff]
        %v246 = vld [vmem:[%s241 + $0x8] sm:$0xff]
        %v247 = vld [vmem:[%s241 + $0x10] sm:$0xff]
        %v248 = vld [vmem:[%s241 + $0x18] sm:$0xf]
        %v249 = vld [vmem:[%s241 + $0x1c] sm:$0xff]
        %v250 = vld [vmem:[%s241 + $0x24] sm:$0xff]
        %v251 = vld [vmem:[%s241 + $0x2c] sm:$0xff]
        %v252 = vld [vmem:[%s241 + $0x34] sm:$0xf]
        %v253 = vld [vmem:[%s241 + $0x38] sm:$0xff]
        %v254 = vld [vmem:[%s241 + $0x40] sm:$0xff]
        %v255 = vld [vmem:[%s241 + $0x48] sm:$0xff]
        %v256 = vld [vmem:[%s241 + $0x50] sm:$0xf]
        %v257 = vld [vmem:[%s241 + $0x54] sm:$0xff]
        %v258 = vld [vmem:[%s241 + $0x5c] sm:$0xff]
        %v259 = vld [vmem:[%s241 + $0x64] sm:$0xff]
        %v260 = vld [vmem:[%s241 + $0x6c] sm:$0xf]
        %v261 = vld [vmem:[%s241 + $0x70] sm:$0xff]
        %v262 = vld [vmem:[%s241 + $0x78] sm:$0xff]
        %v263 = vld [vmem:[%s241 + $0x80] sm:$0xff]
        %v264 = vld [vmem:[%s241 + $0x88] sm:$0xf]
        %v265 = vld [vmem:[%s241 + $0x8c] sm:$0xff]
        %v266 = vld [vmem:[%s241 + $0x94] sm:$0xff]
        %v267 = vld [vmem:[%s241 + $0x9c] sm:$0xff]
        %v268 = vld [vmem:[%s241 + $0xa4] sm:$0xf]
        %v269 = vld [vmem:[%s241 + $0xa8] sm:$0xff]
        %v270 = vld [vmem:[%s241 + $0xb0] sm:$0xff]
        %v271 = vld [vmem:[%s241 + $0xb8] sm:$0xff]
        %v272 = vld [vmem:[%s241 + $0xc0] sm:$0xf]
        %v273 = vld [vmem:[%s241 + $0xc4] sm:$0xff]
        %v274 = vld [vmem:[%s241 + $0xcc] sm:$0xff]
        %v275 = vld [vmem:[%s241 + $0xd4] sm:$0xff]
        %v276 = vld [vmem:[%s241 + $0xdc] sm:$0xf]
        %v277 = vld [vmem:[%s241 + $0xe0] sm:$0xff]
        %v278 = vld [vmem:[%s241 + $0xe8] sm:$0xff]
        %v279 = vld [vmem:[%s241 + $0xf0] sm:$0xff]
        %v280 = vld [vmem:[%s241 + $0xf8] sm:$0xf]
        %v281 = vld [vmem:[%s241 + $0xfc] sm:$0xff]
        %v282 = vld [vmem:[%s241 + $0x104] sm:$0xff]
        %v283 = vld [vmem:[%s241 + $0x10c] sm:$0xff]
        %v284 = vld [vmem:[%s241 + $0x114] sm:$0xf]
        %v285 = vld [vmem:[%s241 + $0x118] sm:$0xff]
        %v286 = vld [vmem:[%s241 + $0x120] sm:$0xff]
        %v287 = vld [vmem:[%s241 + $0x128] sm:$0xff]
        %v288 = vld [vmem:[%s241 + $0x130] sm:$0xf]
        %v289 = vld [vmem:[%s241 + $0x134] sm:$0xff]
        %v290 = vld [vmem:[%s241 + $0x13c] sm:$0xff]
        %v291 = vld [vmem:[%s241 + $0x144] sm:$0xff]
        %v292 = vld [vmem:[%s241 + $0x14c] sm:$0xf]
        %v293 = vld [vmem:[%s241 + $0x150] sm:$0xff]
        %v294 = vld [vmem:[%s241 + $0x158] sm:$0xff]
        %v295 = vld [vmem:[%s241 + $0x160] sm:$0xff]
        %v296 = vld [vmem:[%s241 + $0x168] sm:$0xf]
        %v297 = vld [vmem:[%s241 + $0x16c] sm:$0xff]
        %v298 = vld [vmem:[%s241 + $0x174] sm:$0xff]
        %v299 = vld [vmem:[%s241 + $0x17c] sm:$0xff]
        %v300 = vld [vmem:[%s241 + $0x184] sm:$0xf]
        %v301 = vld [vmem:[%s241 + $0x188] sm:$0xff]
        %v302 = vld [vmem:[%s241 + $0x190] sm:$0xff]
        %v303 = vld [vmem:[%s241 + $0x198] sm:$0xff]
        %v304 = vld [vmem:[%s241 + $0x1a0] sm:$0xf]
        %v305 = vld [vmem:[%s241 + $0x1a4] sm:$0xff]
        %v306 = vld [vmem:[%s241 + $0x1ac] sm:$0xff]
        %v307 = vld [vmem:[%s241 + $0x1b4] sm:$0xff]
        %v308 = vld [vmem:[%s241 + $0x1bc] sm:$0xf]
        %v309 = vld [vmem:[%s1] sm:$0xff]
        %v310 = vld [vmem:[%s1 + $0x8] sm:$0xff]
        %v311 = vld [vmem:[%s1 + $0x10] sm:$0xff]
        %v312 = vld [vmem:[%s1 + $0x18] sm:$0xff]
        %v313 = vld [vmem:[%s1 + $0x20] sm:$0xff]
        %v314 = vld [vmem:[%s1 + $0x28] sm:$0xff]
        %v315 = vld [vmem:[%s1 + $0x30] sm:$0xff]
        %v316 = vld [vmem:[%s1 + $0x38] sm:$0xff]
        %v317 = vld [vmem:[%s1 + $0x40] sm:$0xff]
        %v318 = vld [vmem:[%s1 + $0x48] sm:$0xff]
        %v319 = vld [vmem:[%s1 + $0x50] sm:$0xff]
        %v320 = vld [vmem:[%s1 + $0x58] sm:$0xff]
        %v321 = vld [vmem:[%s1 + $0x60] sm:$0xff]
        %v322 = vld [vmem:[%s1 + $0x68] sm:$0xff]
        %v323 = vld [vmem:[%s1 + $0x70] sm:$0xff]
        %v324 = vld [vmem:[%s1 + $0x78] sm:$0xff]
        %v325 = vld [vmem:[%s1 + $0x80] sm:$0xff]
        %v326 = vld [vmem:[%s1 + $0x88] sm:$0xff]
        %v327 = vld [vmem:[%s1 + $0x90] sm:$0xff]
        %v328 = vld [vmem:[%s1 + $0x98] sm:$0xff]
        %v329 = vld [vmem:[%s1 + $0xa0] sm:$0xff]
        %v330 = vld [vmem:[%s1 + $0xa8] sm:$0xff]
        %v331 = vld [vmem:[%s1 + $0xb0] sm:$0xff]
        %v332 = vld [vmem:[%s1 + $0xb8] sm:$0xff]
        %v333 = vld [vmem:[%s1 + $0xc0] sm:$0xff]
        %v334 = vld [vmem:[%s1 + $0xc8] sm:$0xff]
        %v335 = vld [vmem:[%s1 + $0xd0] sm:$0xff]
        %v336 = vld [vmem:[%s1 + $0xd8] sm:$0xff]
        %v337 = vld [vmem:[%s1 + $0xe0] sm:$0xff]
        %v338 = vld [vmem:[%s1 + $0xe8] sm:$0xff]
        %v339 = vld [vmem:[%s1 + $0xf0] sm:$0xff]
        %v340 = vld [vmem:[%s1 + $0xf8] sm:$0xff]
        %v341 = vld [vmem:[%s1 + $0x100] sm:$0xff]
        %v342 = vld [vmem:[%s1 + $0x108] sm:$0xff]
        %v343 = vld [vmem:[%s1 + $0x110] sm:$0xff]
        %v344 = vld [vmem:[%s1 + $0x118] sm:$0xff]
        %v345 = vld [vmem:[%s1 + $0x120] sm:$0xff]
        %v346 = vld [vmem:[%s1 + $0x128] sm:$0xff]
        %v347 = vld [vmem:[%s1 + $0x130] sm:$0xff]
        %v348 = vld [vmem:[%s1 + $0x138] sm:$0xff]
        %v349 = vld [vmem:[%s1 + $0x140] sm:$0xff]
        %v350 = vld [vmem:[%s1 + $0x148] sm:$0xff]
        %v351 = vld [vmem:[%s1 + $0x150] sm:$0xff]
        %v352 = vld [vmem:[%s1 + $0x158] sm:$0xff]
        %v353 = vld [vmem:[%s1 + $0x160] sm:$0xff]
        %v354 = vld [vmem:[%s1 + $0x168] sm:$0xff]
        %v355 = vld [vmem:[%s1 + $0x170] sm:$0xff]
        %v356 = vld [vmem:[%s1 + $0x178] sm:$0xff]
        %v357 = vld [vmem:[%s1 + $0x180] sm:$0xff]
        %v358 = vld [vmem:[%s1 + $0x188] sm:$0xff]
        %v359 = vld [vmem:[%s1 + $0x190] sm:$0xff]
        %v360 = vld [vmem:[%s1 + $0x198] sm:$0xff]
        %v361 = vld [vmem:[%s1 + $0x1a0] sm:$0xff]
        %v362 = vld [vmem:[%s1 + $0x1a8] sm:$0xff]
        %v363 = vld [vmem:[%s1 + $0x1b0] sm:$0xff]
        %v364 = vld [vmem:[%s1 + $0x1b8] sm:$0xff]
        %v365 = vld [vmem:[%s1 + $0x1c0] sm:$0xff]
        %v366 = vld [vmem:[%s1 + $0x1c8] sm:$0xff]
        %v367 = vld [vmem:[%s1 + $0x1d0] sm:$0xff]
        %v368 = vld [vmem:[%s1 + $0x1d8] sm:$0xff]
        %v369 = vld [vmem:[%s1 + $0x1e0] sm:$0xff]
        %v370 = vld [vmem:[%s1 + $0x1e8] sm:$0xff]
        %v371 = vld [vmem:[%s1 + $0x1f0] sm:$0xff]
        %v372 = vld [vmem:[%s1 + $0x1f8] sm:$0xff]
        %v373 = vld [vmem:[%s1 + $0x200] sm:$0xff]
        %v374 = vld [vmem:[%s1 + $0x208] sm:$0xff]
        %v375 = vld [vmem:[%s1 + $0x210] sm:$0xff]
        %v376 = vld [vmem:[%s1 + $0x218] sm:$0xff]
        %v377 = vld [vmem:[%s1 + $0x220] sm:$0xff]
        %v378 = vld [vmem:[%s1 + $0x228] sm:$0xff]
        %v379 = vld [vmem:[%s1 + $0x230] sm:$0xff]
        %v380 = vld [vmem:[%s1 + $0x238] sm:$0xff]
        %v381 = vld [vmem:[%s1 + $0x240] sm:$0xff]
        %v382 = vld [vmem:[%s1 + $0x248] sm:$0xff]
        %v383 = vld [vmem:[%s1 + $0x250] sm:$0xff]
        %v384 = vld [vmem:[%s1 + $0x258] sm:$0xff]
        %v385 = vld [vmem:[%s1 + $0x260] sm:$0xff]
        %v386 = vld [vmem:[%s1 + $0x268] sm:$0xff]
        %v387 = vld [vmem:[%s1 + $0x270] sm:$0xff]
        %v388 = vld [vmem:[%s1 + $0x278] sm:$0xff]
        %v389 = vld [vmem:[%s1 + $0x280] sm:$0xff]
        %v390 = vld [vmem:[%s1 + $0x288] sm:$0xff]
        %v391 = vld [vmem:[%s1 + $0x290] sm:$0xff]
        %v392 = vld [vmem:[%s1 + $0x298] sm:$0xff]
        %v393 = vld [vmem:[%s1 + $0x2a0] sm:$0xff]
        %v394 = vld [vmem:[%s1 + $0x2a8] sm:$0xff]
        %v395 = vld [vmem:[%s1 + $0x2b0] sm:$0xff]
        %v396 = vld [vmem:[%s1 + $0x2b8] sm:$0xff]
        %v397 = vld [vmem:[%s1 + $0x2c0] sm:$0xff]
        %v398 = vld [vmem:[%s1 + $0x2c8] sm:$0xff]
        %v399 = vld [vmem:[%s1 + $0x2d0] sm:$0xff]
        %v400 = vld [vmem:[%s1 + $0x2d8] sm:$0xff]
        %v401 = vld [vmem:[%s1 + $0x2e0] sm:$0xff]
        %v402 = vld [vmem:[%s1 + $0x2e8] sm:$0xff]
        %v403 = vld [vmem:[%s1 + $0x2f0] sm:$0xff]
        %v404 = vld [vmem:[%s1 + $0x2f8] sm:$0xff]
        %v405 = vld [vmem:[%s1 + $0x300] sm:$0xff]
        %v406 = vld [vmem:[%s1 + $0x308] sm:$0xff]
        %v407 = vld [vmem:[%s1 + $0x310] sm:$0xff]
        %v408 = vld [vmem:[%s1 + $0x318] sm:$0xff]
        %v409 = vld [vmem:[%s1 + $0x320] sm:$0xff]
        %v410 = vld [vmem:[%s1 + $0x328] sm:$0xff]
        %v411 = vld [vmem:[%s1 + $0x330] sm:$0xff]
        %v412 = vld [vmem:[%s1 + $0x338] sm:$0xff]
        %v413 = vld [vmem:[%s1 + $0x340] sm:$0xff]
        %v414 = vld [vmem:[%s1 + $0x348] sm:$0xff]
        %v415 = vld [vmem:[%s1 + $0x350] sm:$0xff]
        %v416 = vld [vmem:[%s1 + $0x358] sm:$0xff]
        %v417 = vld [vmem:[%s1 + $0x360] sm:$0xff]
        %v418 = vld [vmem:[%s1 + $0x368] sm:$0xff]
        %v419 = vld [vmem:[%s1 + $0x370] sm:$0xff]
        %v420 = vld [vmem:[%s1 + $0x378] sm:$0xff]
        %v421 = vld [vmem:[%s1 + $0x380] sm:$0xff]
        %v422 = vld [vmem:[%s1 + $0x388] sm:$0xff]
        %v423 = vld [vmem:[%s1 + $0x390] sm:$0xff]
        %v424 = vld [vmem:[%s1 + $0x398] sm:$0xff]
        %v425 = vld [vmem:[%s1 + $0x3a0] sm:$0xff]
        %v426 = vld [vmem:[%s1 + $0x3a8] sm:$0xff]
        %v427 = vld [vmem:[%s1 + $0x3b0] sm:$0xff]
        %v428 = vld [vmem:[%s1 + $0x3b8] sm:$0xff]
        %v429 = vld [vmem:[%s1 + $0x3c0] sm:$0xff]
        %v430 = vld [vmem:[%s1 + $0x3c8] sm:$0xff]
        %v431 = vld [vmem:[%s1 + $0x3d0] sm:$0xff]
        %v432 = vld [vmem:[%s1 + $0x3d8] sm:$0xff]
        %v433 = vld [vmem:[%s1 + $0x3e0] sm:$0xff]
        %v434 = vld [vmem:[%s1 + $0x3e8] sm:$0xff]
        %v435 = vld [vmem:[%s1 + $0x3f0] sm:$0xff]
        %v436 = vld [vmem:[%s1 + $0x3f8] sm:$0xff]
        %v437 = vld [vmem:[%s1 + $0x400] sm:$0xff]
        %v438 = vld [vmem:[%s1 + $0x408] sm:$0xff]
        %v439 = vld [vmem:[%s1 + $0x410] sm:$0xff]
        %v440 = vld [vmem:[%s1 + $0x418] sm:$0xff]
        %v441 = vld [vmem:[%s1 + $0x420] sm:$0xff]
        %v442 = vld [vmem:[%s1 + $0x428] sm:$0xff]
        %v443 = vld [vmem:[%s1 + $0x430] sm:$0xff]
        %v444 = vld [vmem:[%s1 + $0x438] sm:$0xff]
        %v445 = vld [vmem:[%s1 + $0x440] sm:$0xff]
        %v446 = vld [vmem:[%s1 + $0x448] sm:$0xff]
        %v447 = vld [vmem:[%s1 + $0x450] sm:$0xff]
        %v448 = vld [vmem:[%s1 + $0x458] sm:$0xff]
        %v449 = vld [vmem:[%s1 + $0x460] sm:$0xff]
        %v450 = vld [vmem:[%s1 + $0x468] sm:$0xff]
        %v451 = vld [vmem:[%s1 + $0x470] sm:$0xff]
        %v452 = vld [vmem:[%s1 + $0x478] sm:$0xff]
        %v453 = vld [vmem:[%s1 + $0x480] sm:$0xff]
        %v454 = vld [vmem:[%s1 + $0x488] sm:$0xff]
        %v455 = vld [vmem:[%s1 + $0x490] sm:$0xff]
        %v456 = vld [vmem:[%s1 + $0x498] sm:$0xff]
        %v457 = vld [vmem:[%s1 + $0x4a0] sm:$0xff]
        %v458 = vld [vmem:[%s1 + $0x4a8] sm:$0xff]
        %v459 = vld [vmem:[%s1 + $0x4b0] sm:$0xff]
        %v460 = vld [vmem:[%s1 + $0x4b8] sm:$0xff]
        %v461 = vld [vmem:[%s1 + $0x4c0] sm:$0xff]
        %v462 = vld [vmem:[%s1 + $0x4c8] sm:$0xff]
        %v463 = vld [vmem:[%s1 + $0x4d0] sm:$0xff]
        %v464 = vld [vmem:[%s1 + $0x4d8] sm:$0xff]
        %v465 = vld [vmem:[%s1 + $0x4e0] sm:$0xff]
        %v466 = vld [vmem:[%s1 + $0x4e8] sm:$0xff]
        %v467 = vld [vmem:[%s1 + $0x4f0] sm:$0xff]
        %v468 = vld [vmem:[%s1 + $0x4f8] sm:$0xff]
        %v469 = vld [vmem:[%s1 + $0x500] sm:$0xff]
        %v470 = vld [vmem:[%s1 + $0x508] sm:$0xff]
        %v471 = vld [vmem:[%s1 + $0x510] sm:$0xff]
        %v472 = vld [vmem:[%s1 + $0x518] sm:$0xff]
        %v473 = vld [vmem:[%s1 + $0x520] sm:$0xff]
        %v474 = vld [vmem:[%s1 + $0x528] sm:$0xff]
        %v475 = vld [vmem:[%s1 + $0x530] sm:$0xff]
        %v476 = vld [vmem:[%s1 + $0x538] sm:$0xff]
        %v477 = vld [vmem:[%s1 + $0x540] sm:$0xff]
        %v478 = vld [vmem:[%s1 + $0x548] sm:$0xff]
        %v479 = vld [vmem:[%s1 + $0x550] sm:$0xff]
        %v480 = vld [vmem:[%s1 + $0x558] sm:$0xff]
        %v481 = vld [vmem:[%s1 + $0x560] sm:$0xff]
        %v482 = vld [vmem:[%s1 + $0x568] sm:$0xff]
        %v483 = vld [vmem:[%s1 + $0x570] sm:$0xff]
        %v484 = vld [vmem:[%s1 + $0x578] sm:$0xff]
        %v485 = vld [vmem:[%s1 + $0x580] sm:$0xff]
        %v486 = vld [vmem:[%s1 + $0x588] sm:$0xff]
        %v487 = vld [vmem:[%s1 + $0x590] sm:$0xff]
        %v488 = vld [vmem:[%s1 + $0x598] sm:$0xff]
        %v489 = vld [vmem:[%s1 + $0x5a0] sm:$0xff]
        %v490 = vld [vmem:[%s1 + $0x5a8] sm:$0xff]
        %v491 = vld [vmem:[%s1 + $0x5b0] sm:$0xff]
        %v492 = vld [vmem:[%s1 + $0x5b8] sm:$0xff]
        %v493 = vld [vmem:[%s1 + $0x5c0] sm:$0xff]
        %v494 = vld [vmem:[%s1 + $0x5c8] sm:$0xff]
        %v495 = vld [vmem:[%s1 + $0x5d0] sm:$0xff]
        %v496 = vld [vmem:[%s1 + $0x5d8] sm:$0xff]
        %v497 = vld [vmem:[%s1 + $0x5e0] sm:$0xff]
        %v498 = vld [vmem:[%s1 + $0x5e8] sm:$0xff]
        %v499 = vld [vmem:[%s1 + $0x5f0] sm:$0xff]
        %v500 = vld [vmem:[%s1 + $0x5f8] sm:$0xff]
        %v501 = vld [vmem:[%s1 + $0x600] sm:$0xff]
        %v502 = vld [vmem:[%s1 + $0x608] sm:$0xff]
        %v503 = vld [vmem:[%s1 + $0x610] sm:$0xff]
        %v504 = vld [vmem:[%s1 + $0x618] sm:$0xff]
        %v505 = vld [vmem:[%s2] sm:$0xf]
        %v507 = vlaneseq
        %v508 = vshrl.u32 %v507, 7
        %v509 = vsub.s32 0, %v508
        %v510 = vrot.slane %v505, %v509
        %v511 = vlaneseq
        %v512 = vshrl.u32 %v511, 7
        %v513 = vsub.s32 1, %v512
        %v514 = vrot.slane %v505, %v513
        %v515 = vlaneseq
        %v516 = vshrl.u32 %v515, 7
        %v517 = vsub.s32 2, %v516
        %v518 = vrot.slane %v505, %v517
        %v519 = vlaneseq
        %v520 = vshrl.u32 %v519, 7
        %v521 = vsub.s32 3, %v520
        %v522 = vrot.slane %v505, %v521
        %v591 = vunpack.c.l.b16 %v245
        %v592 = vunpack.c.h.b16 %v245
        %v593 = vunpack.c.l.b16 %v246
        %v594 = vunpack.c.h.b16 %v246
        %v595 = vunpack.c.l.b16 %v247
        %v596 = vunpack.c.h.b16 %v247
        %v597 = vunpack.c.l.b16 %v248
        %v598 = vunpack.c.l.b16 %v249
        %v599 = vunpack.c.h.b16 %v249
        %v600 = vunpack.c.l.b16 %v250
        %v601 = vunpack.c.h.b16 %v250
        %v602 = vunpack.c.l.b16 %v251
        %v603 = vunpack.c.h.b16 %v251
        %v604 = vunpack.c.l.b16 %v252
        %v605 = vunpack.c.l.b16 %v253
        %v606 = vunpack.c.h.b16 %v253
        %v607 = vunpack.c.l.b16 %v254
        %v608 = vunpack.c.h.b16 %v254
        %v609 = vunpack.c.l.b16 %v255
        %v610 = vunpack.c.h.b16 %v255
        %v611 = vunpack.c.l.b16 %v256
        %v612 = vunpack.c.l.b16 %v257
        %v613 = vunpack.c.h.b16 %v257
        %v614 = vunpack.c.l.b16 %v258
        %v615 = vunpack.c.h.b16 %v258
        %v616 = vunpack.c.l.b16 %v259
        %v617 = vunpack.c.h.b16 %v259
        %v618 = vunpack.c.l.b16 %v260
        %v619 = vunpack.c.l.b16 %v261
        %v620 = vunpack.c.h.b16 %v261
        %v621 = vunpack.c.l.b16 %v262
        %v622 = vunpack.c.h.b16 %v262
        %v623 = vunpack.c.l.b16 %v263
        %v624 = vunpack.c.h.b16 %v263
        %v625 = vunpack.c.l.b16 %v264
        %v626 = vunpack.c.l.b16 %v265
        %v627 = vunpack.c.h.b16 %v265
        %v628 = vunpack.c.l.b16 %v266
        %v629 = vunpack.c.h.b16 %v266
        %v630 = vunpack.c.l.b16 %v267
        %v631 = vunpack.c.h.b16 %v267
        %v632 = vunpack.c.l.b16 %v268
        %v633 = vunpack.c.l.b16 %v269
        %v634 = vunpack.c.h.b16 %v269
        %v635 = vunpack.c.l.b16 %v270
        %v636 = vunpack.c.h.b16 %v270
        %v637 = vunpack.c.l.b16 %v271
        %v638 = vunpack.c.h.b16 %v271
        %v639 = vunpack.c.l.b16 %v272
        %v640 = vunpack.c.l.b16 %v273
        %v641 = vunpack.c.h.b16 %v273
        %v642 = vunpack.c.l.b16 %v274
        %v643 = vunpack.c.h.b16 %v274
        %v644 = vunpack.c.l.b16 %v275
        %v645 = vunpack.c.h.b16 %v275
        %v646 = vunpack.c.l.b16 %v276
        %v647 = vunpack.c.l.b16 %v277
        %v648 = vunpack.c.h.b16 %v277
        %v649 = vunpack.c.l.b16 %v278
        %v650 = vunpack.c.h.b16 %v278
        %v651 = vunpack.c.l.b16 %v279
        %v652 = vunpack.c.h.b16 %v279
        %v653 = vunpack.c.l.b16 %v280
        %v654 = vunpack.c.l.b16 %v281
        %v655 = vunpack.c.h.b16 %v281
        %v656 = vunpack.c.l.b16 %v282
        %v657 = vunpack.c.h.b16 %v282
        %v658 = vunpack.c.l.b16 %v283
        %v659 = vunpack.c.h.b16 %v283
        %v660 = vunpack.c.l.b16 %v284
        %v661 = vunpack.c.l.b16 %v285
        %v662 = vunpack.c.h.b16 %v285
        %v663 = vunpack.c.l.b16 %v286
        %v664 = vunpack.c.h.b16 %v286
        %v665 = vunpack.c.l.b16 %v287
        %v666 = vunpack.c.h.b16 %v287
        %v667 = vunpack.c.l.b16 %v288
        %v668 = vunpack.c.l.b16 %v289
        %v669 = vunpack.c.h.b16 %v289
        %v670 = vunpack.c.l.b16 %v290
        %v671 = vunpack.c.h.b16 %v290
        %v672 = vunpack.c.l.b16 %v291
        %v673 = vunpack.c.h.b16 %v291
        %v674 = vunpack.c.l.b16 %v292
        %v675 = vunpack.c.l.b16 %v293
        %v676 = vunpack.c.h.b16 %v293
        %v677 = vunpack.c.l.b16 %v294
        %v678 = vunpack.c.h.b16 %v294
        %v679 = vunpack.c.l.b16 %v295
        %v680 = vunpack.c.h.b16 %v295
        %v681 = vunpack.c.l.b16 %v296
        %v682 = vunpack.c.l.b16 %v297
        %v683 = vunpack.c.h.b16 %v297
        %v684 = vunpack.c.l.b16 %v298
        %v685 = vunpack.c.h.b16 %v298
        %v686 = vunpack.c.l.b16 %v299
        %v687 = vunpack.c.h.b16 %v299
        %v688 = vunpack.c.l.b16 %v300
        %v689 = vunpack.c.l.b16 %v301
        %v690 = vunpack.c.h.b16 %v301
        %v691 = vunpack.c.l.b16 %v302
        %v692 = vunpack.c.h.b16 %v302
        %v693 = vunpack.c.l.b16 %v303
        %v694 = vunpack.c.h.b16 %v303
        %v695 = vunpack.c.l.b16 %v304
        %v696 = vunpack.c.l.b16 %v305
        %v697 = vunpack.c.h.b16 %v305
        %v698 = vunpack.c.l.b16 %v306
        %v699 = vunpack.c.h.b16 %v306
        %v700 = vunpack.c.l.b16 %v307
        %v701 = vunpack.c.h.b16 %v307
        %v702 = vunpack.c.l.b16 %v308
        %v703 = vpack.c.b16 %v598, %v591
        %v704 = vpack.c.b16 %v599, %v592
        %v705 = vpack.c.b16 %v600, %v593
        %v706 = vpack.c.b16 %v601, %v594
        %v707 = vpack.c.b16 %v602, %v595
        %v708 = vpack.c.b16 %v603, %v596
        %v709 = vpack.c.b16 %v604, %v597
        %v710 = vpack.c.b16 %v612, %v605
        %v711 = vpack.c.b16 %v613, %v606
        %v712 = vpack.c.b16 %v614, %v607
        %v713 = vpack.c.b16 %v615, %v608
        %v714 = vpack.c.b16 %v616, %v609
        %v715 = vpack.c.b16 %v617, %v610
        %v716 = vpack.c.b16 %v618, %v611
        %v717 = vpack.c.b16 %v626, %v619
        %v718 = vpack.c.b16 %v627, %v620
        %v719 = vpack.c.b16 %v628, %v621
        %v720 = vpack.c.b16 %v629, %v622
        %v721 = vpack.c.b16 %v630, %v623
        %v722 = vpack.c.b16 %v631, %v624
        %v723 = vpack.c.b16 %v632, %v625
        %v724 = vpack.c.b16 %v640, %v633
        %v725 = vpack.c.b16 %v641, %v634
        %v726 = vpack.c.b16 %v642, %v635
        %v727 = vpack.c.b16 %v643, %v636
        %v728 = vpack.c.b16 %v644, %v637
        %v729 = vpack.c.b16 %v645, %v638
        %v730 = vpack.c.b16 %v646, %v639
        %v731 = vpack.c.b16 %v654, %v647
        %v732 = vpack.c.b16 %v655, %v648
        %v733 = vpack.c.b16 %v656, %v649
        %v734 = vpack.c.b16 %v657, %v650
        %v735 = vpack.c.b16 %v658, %v651
        %v736 = vpack.c.b16 %v659, %v652
        %v737 = vpack.c.b16 %v660, %v653
        %v738 = vpack.c.b16 %v668, %v661
        %v739 = vpack.c.b16 %v669, %v662
        %v740 = vpack.c.b16 %v670, %v663
        %v741 = vpack.c.b16 %v671, %v664
        %v742 = vpack.c.b16 %v672, %v665
        %v743 = vpack.c.b16 %v673, %v666
        %v744 = vpack.c.b16 %v674, %v667
        %v745 = vpack.c.b16 %v682, %v675
        %v746 = vpack.c.b16 %v683, %v676
        %v747 = vpack.c.b16 %v684, %v677
        %v748 = vpack.c.b16 %v685, %v678
        %v749 = vpack.c.b16 %v686, %v679
        %v750 = vpack.c.b16 %v687, %v680
        %v751 = vpack.c.b16 %v688, %v681
        %v752 = vpack.c.b16 %v696, %v689
        %v753 = vpack.c.b16 %v697, %v690
        %v754 = vpack.c.b16 %v698, %v691
        %v755 = vpack.c.b16 %v699, %v692
        %v756 = vpack.c.b16 %v700, %v693
        %v757 = vpack.c.b16 %v701, %v694
        %v758 = vpack.c.b16 %v702, %v695
        %v1003 = vunpack.c.l.b16 %v309
        %v1004 = vunpack.c.h.b16 %v309
        %v1005 = vunpack.c.l.b16 %v310
        %v1006 = vunpack.c.h.b16 %v310
        %v1007 = vunpack.c.l.b16 %v311
        %v1008 = vunpack.c.h.b16 %v311
        %v1009 = vunpack.c.l.b16 %v312
        %v1010 = vunpack.c.h.b16 %v312
        %v1011 = vunpack.c.l.b16 %v313
        %v1012 = vunpack.c.h.b16 %v313
        %v1013 = vunpack.c.l.b16 %v314
        %v1014 = vunpack.c.h.b16 %v314
        %v1015 = vunpack.c.l.b16 %v315
        %v1016 = vunpack.c.h.b16 %v315
        %v1017 = vunpack.c.l.b16 %v316
        %v1018 = vunpack.c.h.b16 %v316
        %v1019 = vunpack.c.l.b16 %v317
        %v1020 = vunpack.c.h.b16 %v317
        %v1021 = vunpack.c.l.b16 %v318
        %v1022 = vunpack.c.h.b16 %v318
        %v1023 = vunpack.c.l.b16 %v319
        %v1024 = vunpack.c.h.b16 %v319
        %v1025 = vunpack.c.l.b16 %v320
        %v1026 = vunpack.c.h.b16 %v320
        %v1027 = vunpack.c.l.b16 %v321
        %v1028 = vunpack.c.h.b16 %v321
        %v1029 = vunpack.c.l.b16 %v322
        %v1030 = vunpack.c.h.b16 %v322
        %v1031 = vunpack.c.l.b16 %v323
        %v1032 = vunpack.c.h.b16 %v323
        %v1033 = vunpack.c.l.b16 %v324
        %v1034 = vunpack.c.h.b16 %v324
        %v1035 = vunpack.c.l.b16 %v325
        %v1036 = vunpack.c.h.b16 %v325
        %v1037 = vunpack.c.l.b16 %v326
        %v1038 = vunpack.c.h.b16 %v326
        %v1039 = vunpack.c.l.b16 %v327
        %v1040 = vunpack.c.h.b16 %v327
        %v1041 = vunpack.c.l.b16 %v328
        %v1042 = vunpack.c.h.b16 %v328
        %v1043 = vunpack.c.l.b16 %v329
        %v1044 = vunpack.c.h.b16 %v329
        %v1045 = vunpack.c.l.b16 %v330
        %v1046 = vunpack.c.h.b16 %v330
        %v1047 = vunpack.c.l.b16 %v331
        %v1048 = vunpack.c.h.b16 %v331
        %v1049 = vunpack.c.l.b16 %v332
        %v1050 = vunpack.c.h.b16 %v332
        %v1051 = vunpack.c.l.b16 %v333
        %v1052 = vunpack.c.h.b16 %v333
        %v1053 = vunpack.c.l.b16 %v334
        %v1054 = vunpack.c.h.b16 %v334
        %v1055 = vunpack.c.l.b16 %v335
        %v1056 = vunpack.c.h.b16 %v335
        %v1057 = vunpack.c.l.b16 %v336
        %v1058 = vunpack.c.h.b16 %v336
        %v1059 = vunpack.c.l.b16 %v337
        %v1060 = vunpack.c.h.b16 %v337
        %v1061 = vunpack.c.l.b16 %v338
        %v1062 = vunpack.c.h.b16 %v338
        %v1063 = vunpack.c.l.b16 %v339
        %v1064 = vunpack.c.h.b16 %v339
        %v1065 = vunpack.c.l.b16 %v340
        %v1066 = vunpack.c.h.b16 %v340
        %v1067 = vunpack.c.l.b16 %v341
        %v1068 = vunpack.c.h.b16 %v341
        %v1069 = vunpack.c.l.b16 %v342
        %v1070 = vunpack.c.h.b16 %v342
        %v1071 = vunpack.c.l.b16 %v343
        %v1072 = vunpack.c.h.b16 %v343
        %v1073 = vunpack.c.l.b16 %v344
        %v1074 = vunpack.c.h.b16 %v344
        %v1075 = vunpack.c.l.b16 %v345
        %v1076 = vunpack.c.h.b16 %v345
        %v1077 = vunpack.c.l.b16 %v346
        %v1078 = vunpack.c.h.b16 %v346
        %v1079 = vunpack.c.l.b16 %v347
        %v1080 = vunpack.c.h.b16 %v347
        %v1081 = vunpack.c.l.b16 %v348
        %v1082 = vunpack.c.h.b16 %v348
        %v1083 = vunpack.c.l.b16 %v349
        %v1084 = vunpack.c.h.b16 %v349
        %v1085 = vunpack.c.l.b16 %v350
        %v1086 = vunpack.c.h.b16 %v350
        %v1087 = vunpack.c.l.b16 %v351
        %v1088 = vunpack.c.h.b16 %v351
        %v1089 = vunpack.c.l.b16 %v352
        %v1090 = vunpack.c.h.b16 %v352
        %v1091 = vunpack.c.l.b16 %v353
        %v1092 = vunpack.c.h.b16 %v353
        %v1093 = vunpack.c.l.b16 %v354
        %v1094 = vunpack.c.h.b16 %v354
        %v1095 = vunpack.c.l.b16 %v355
        %v1096 = vunpack.c.h.b16 %v355
        %v1097 = vunpack.c.l.b16 %v356
        %v1098 = vunpack.c.h.b16 %v356
        %v1099 = vunpack.c.l.b16 %v357
        %v1100 = vunpack.c.h.b16 %v357
        %v1101 = vunpack.c.l.b16 %v358
        %v1102 = vunpack.c.h.b16 %v358
        %v1103 = vunpack.c.l.b16 %v359
        %v1104 = vunpack.c.h.b16 %v359
        %v1105 = vunpack.c.l.b16 %v360
        %v1106 = vunpack.c.h.b16 %v360
        %v1107 = vunpack.c.l.b16 %v361
        %v1108 = vunpack.c.h.b16 %v361
        %v1109 = vunpack.c.l.b16 %v362
        %v1110 = vunpack.c.h.b16 %v362
        %v1111 = vunpack.c.l.b16 %v363
        %v1112 = vunpack.c.h.b16 %v363
        %v1113 = vunpack.c.l.b16 %v364
        %v1114 = vunpack.c.h.b16 %v364
        %v1115 = vunpack.c.l.b16 %v365
        %v1116 = vunpack.c.h.b16 %v365
        %v1117 = vunpack.c.l.b16 %v366
        %v1118 = vunpack.c.h.b16 %v366
        %v1119 = vunpack.c.l.b16 %v367
        %v1120 = vunpack.c.h.b16 %v367
        %v1121 = vunpack.c.l.b16 %v368
        %v1122 = vunpack.c.h.b16 %v368
        %v1123 = vunpack.c.l.b16 %v369
        %v1124 = vunpack.c.h.b16 %v369
        %v1125 = vunpack.c.l.b16 %v370
        %v1126 = vunpack.c.h.b16 %v370
        %v1127 = vunpack.c.l.b16 %v371
        %v1128 = vunpack.c.h.b16 %v371
        %v1129 = vunpack.c.l.b16 %v372
        %v1130 = vunpack.c.h.b16 %v372
        %v1131 = vunpack.c.l.b16 %v373
        %v1132 = vunpack.c.h.b16 %v373
        %v1133 = vunpack.c.l.b16 %v374
        %v1134 = vunpack.c.h.b16 %v374
        %v1135 = vunpack.c.l.b16 %v375
        %v1136 = vunpack.c.h.b16 %v375
        %v1137 = vunpack.c.l.b16 %v376
        %v1138 = vunpack.c.h.b16 %v376
        %v1139 = vunpack.c.l.b16 %v377
        %v1140 = vunpack.c.h.b16 %v377
        %v1141 = vunpack.c.l.b16 %v378
        %v1142 = vunpack.c.h.b16 %v378
        %v1143 = vunpack.c.l.b16 %v379
        %v1144 = vunpack.c.h.b16 %v379
        %v1145 = vunpack.c.l.b16 %v380
        %v1146 = vunpack.c.h.b16 %v380
        %v1147 = vunpack.c.l.b16 %v381
        %v1148 = vunpack.c.h.b16 %v381
        %v1149 = vunpack.c.l.b16 %v382
        %v1150 = vunpack.c.h.b16 %v382
        %v1151 = vunpack.c.l.b16 %v383
        %v1152 = vunpack.c.h.b16 %v383
        %v1153 = vunpack.c.l.b16 %v384
        %v1154 = vunpack.c.h.b16 %v384
        %v1155 = vunpack.c.l.b16 %v385
        %v1156 = vunpack.c.h.b16 %v385
        %v1157 = vunpack.c.l.b16 %v386
        %v1158 = vunpack.c.h.b16 %v386
        %v1159 = vunpack.c.l.b16 %v387
        %v1160 = vunpack.c.h.b16 %v387
        %v1161 = vunpack.c.l.b16 %v388
        %v1162 = vunpack.c.h.b16 %v388
        %v1163 = vunpack.c.l.b16 %v389
        %v1164 = vunpack.c.h.b16 %v389
        %v1165 = vunpack.c.l.b16 %v390
        %v1166 = vunpack.c.h.b16 %v390
        %v1167 = vunpack.c.l.b16 %v391
        %v1168 = vunpack.c.h.b16 %v391
        %v1169 = vunpack.c.l.b16 %v392
        %v1170 = vunpack.c.h.b16 %v392
        %v1171 = vunpack.c.l.b16 %v393
        %v1172 = vunpack.c.h.b16 %v393
        %v1173 = vunpack.c.l.b16 %v394
        %v1174 = vunpack.c.h.b16 %v394
        %v1175 = vunpack.c.l.b16 %v395
        %v1176 = vunpack.c.h.b16 %v395
        %v1177 = vunpack.c.l.b16 %v396
        %v1178 = vunpack.c.h.b16 %v396
        %v1179 = vunpack.c.l.b16 %v397
        %v1180 = vunpack.c.h.b16 %v397
        %v1181 = vunpack.c.l.b16 %v398
        %v1182 = vunpack.c.h.b16 %v398
        %v1183 = vunpack.c.l.b16 %v399
        %v1184 = vunpack.c.h.b16 %v399
        %v1185 = vunpack.c.l.b16 %v400
        %v1186 = vunpack.c.h.b16 %v400
        %v1187 = vunpack.c.l.b16 %v401
        %v1188 = vunpack.c.h.b16 %v401
        %v1189 = vunpack.c.l.b16 %v402
        %v1190 = vunpack.c.h.b16 %v402
        %v1191 = vunpack.c.l.b16 %v403
        %v1192 = vunpack.c.h.b16 %v403
        %v1193 = vunpack.c.l.b16 %v404
        %v1194 = vunpack.c.h.b16 %v404
        %v1195 = vunpack.c.l.b16 %v405
        %v1196 = vunpack.c.h.b16 %v405
        %v1197 = vunpack.c.l.b16 %v406
        %v1198 = vunpack.c.h.b16 %v406
        %v1199 = vunpack.c.l.b16 %v407
        %v1200 = vunpack.c.h.b16 %v407
        %v1201 = vunpack.c.l.b16 %v408
        %v1202 = vunpack.c.h.b16 %v408
        %v1203 = vunpack.c.l.b16 %v409
        %v1204 = vunpack.c.h.b16 %v409
        %v1205 = vunpack.c.l.b16 %v410
        %v1206 = vunpack.c.h.b16 %v410
        %v1207 = vunpack.c.l.b16 %v411
        %v1208 = vunpack.c.h.b16 %v411
        %v1209 = vunpack.c.l.b16 %v412
        %v1210 = vunpack.c.h.b16 %v412
        %v1211 = vunpack.c.l.b16 %v413
        %v1212 = vunpack.c.h.b16 %v413
        %v1213 = vunpack.c.l.b16 %v414
        %v1214 = vunpack.c.h.b16 %v414
        %v1215 = vunpack.c.l.b16 %v415
        %v1216 = vunpack.c.h.b16 %v415
        %v1217 = vunpack.c.l.b16 %v416
        %v1218 = vunpack.c.h.b16 %v416
        %v1219 = vunpack.c.l.b16 %v417
        %v1220 = vunpack.c.h.b16 %v417
        %v1221 = vunpack.c.l.b16 %v418
        %v1222 = vunpack.c.h.b16 %v418
        %v1223 = vunpack.c.l.b16 %v419
        %v1224 = vunpack.c.h.b16 %v419
        %v1225 = vunpack.c.l.b16 %v420
        %v1226 = vunpack.c.h.b16 %v420
        %v1227 = vunpack.c.l.b16 %v421
        %v1228 = vunpack.c.h.b16 %v421
        %v1229 = vunpack.c.l.b16 %v422
        %v1230 = vunpack.c.h.b16 %v422
        %v1231 = vunpack.c.l.b16 %v423
        %v1232 = vunpack.c.h.b16 %v423
        %v1233 = vunpack.c.l.b16 %v424
        %v1234 = vunpack.c.h.b16 %v424
        %v1235 = vunpack.c.l.b16 %v425
        %v1236 = vunpack.c.h.b16 %v425
        %v1237 = vunpack.c.l.b16 %v426
        %v1238 = vunpack.c.h.b16 %v426
        %v1239 = vunpack.c.l.b16 %v427
        %v1240 = vunpack.c.h.b16 %v427
        %v1241 = vunpack.c.l.b16 %v428
        %v1242 = vunpack.c.h.b16 %v428
        %v1243 = vunpack.c.l.b16 %v429
        %v1244 = vunpack.c.h.b16 %v429
        %v1245 = vunpack.c.l.b16 %v430
        %v1246 = vunpack.c.h.b16 %v430
        %v1247 = vunpack.c.l.b16 %v431
        %v1248 = vunpack.c.h.b16 %v431
        %v1249 = vunpack.c.l.b16 %v432
        %v1250 = vunpack.c.h.b16 %v432
        %v1251 = vunpack.c.l.b16 %v433
        %v1252 = vunpack.c.h.b16 %v433
        %v1253 = vunpack.c.l.b16 %v434
        %v1254 = vunpack.c.h.b16 %v434
        %v1255 = vunpack.c.l.b16 %v435
        %v1256 = vunpack.c.h.b16 %v435
        %v1257 = vunpack.c.l.b16 %v436
        %v1258 = vunpack.c.h.b16 %v436
        %v1259 = vunpack.c.l.b16 %v437
        %v1260 = vunpack.c.h.b16 %v437
        %v1261 = vunpack.c.l.b16 %v438
        %v1262 = vunpack.c.h.b16 %v438
        %v1263 = vunpack.c.l.b16 %v439
        %v1264 = vunpack.c.h.b16 %v439
        %v1265 = vunpack.c.l.b16 %v440
        %v1266 = vunpack.c.h.b16 %v440
        %v1267 = vunpack.c.l.b16 %v441
        %v1268 = vunpack.c.h.b16 %v441
        %v1269 = vunpack.c.l.b16 %v442
        %v1270 = vunpack.c.h.b16 %v442
        %v1271 = vunpack.c.l.b16 %v443
        %v1272 = vunpack.c.h.b16 %v443
        %v1273 = vunpack.c.l.b16 %v444
        %v1274 = vunpack.c.h.b16 %v444
        %v1275 = vunpack.c.l.b16 %v445
        %v1276 = vunpack.c.h.b16 %v445
        %v1277 = vunpack.c.l.b16 %v446
        %v1278 = vunpack.c.h.b16 %v446
        %v1279 = vunpack.c.l.b16 %v447
        %v1280 = vunpack.c.h.b16 %v447
        %v1281 = vunpack.c.l.b16 %v448
        %v1282 = vunpack.c.h.b16 %v448
        %v1283 = vunpack.c.l.b16 %v449
        %v1284 = vunpack.c.h.b16 %v449
        %v1285 = vunpack.c.l.b16 %v450
        %v1286 = vunpack.c.h.b16 %v450
        %v1287 = vunpack.c.l.b16 %v451
        %v1288 = vunpack.c.h.b16 %v451
        %v1289 = vunpack.c.l.b16 %v452
        %v1290 = vunpack.c.h.b16 %v452
        %v1291 = vunpack.c.l.b16 %v453
        %v1292 = vunpack.c.h.b16 %v453
        %v1293 = vunpack.c.l.b16 %v454
        %v1294 = vunpack.c.h.b16 %v454
        %v1295 = vunpack.c.l.b16 %v455
        %v1296 = vunpack.c.h.b16 %v455
        %v1297 = vunpack.c.l.b16 %v456
        %v1298 = vunpack.c.h.b16 %v456
        %v1299 = vunpack.c.l.b16 %v457
        %v1300 = vunpack.c.h.b16 %v457
        %v1301 = vunpack.c.l.b16 %v458
        %v1302 = vunpack.c.h.b16 %v458
        %v1303 = vunpack.c.l.b16 %v459
        %v1304 = vunpack.c.h.b16 %v459
        %v1305 = vunpack.c.l.b16 %v460
        %v1306 = vunpack.c.h.b16 %v460
        %v1307 = vunpack.c.l.b16 %v461
        %v1308 = vunpack.c.h.b16 %v461
        %v1309 = vunpack.c.l.b16 %v462
        %v1310 = vunpack.c.h.b16 %v462
        %v1311 = vunpack.c.l.b16 %v463
        %v1312 = vunpack.c.h.b16 %v463
        %v1313 = vunpack.c.l.b16 %v464
        %v1314 = vunpack.c.h.b16 %v464
        %v1315 = vunpack.c.l.b16 %v465
        %v1316 = vunpack.c.h.b16 %v465
        %v1317 = vunpack.c.l.b16 %v466
        %v1318 = vunpack.c.h.b16 %v466
        %v1319 = vunpack.c.l.b16 %v467
        %v1320 = vunpack.c.h.b16 %v467
        %v1321 = vunpack.c.l.b16 %v468
        %v1322 = vunpack.c.h.b16 %v468
        %v1323 = vunpack.c.l.b16 %v469
        %v1324 = vunpack.c.h.b16 %v469
        %v1325 = vunpack.c.l.b16 %v470
        %v1326 = vunpack.c.h.b16 %v470
        %v1327 = vunpack.c.l.b16 %v471
        %v1328 = vunpack.c.h.b16 %v471
        %v1329 = vunpack.c.l.b16 %v472
        %v1330 = vunpack.c.h.b16 %v472
        %v1331 = vunpack.c.l.b16 %v473
        %v1332 = vunpack.c.h.b16 %v473
        %v1333 = vunpack.c.l.b16 %v474
        %v1334 = vunpack.c.h.b16 %v474
        %v1335 = vunpack.c.l.b16 %v475
        %v1336 = vunpack.c.h.b16 %v475
        %v1337 = vunpack.c.l.b16 %v476
        %v1338 = vunpack.c.h.b16 %v476
        %v1339 = vunpack.c.l.b16 %v477
        %v1340 = vunpack.c.h.b16 %v477
        %v1341 = vunpack.c.l.b16 %v478
        %v1342 = vunpack.c.h.b16 %v478
        %v1343 = vunpack.c.l.b16 %v479
        %v1344 = vunpack.c.h.b16 %v479
        %v1345 = vunpack.c.l.b16 %v480
        %v1346 = vunpack.c.h.b16 %v480
        %v1347 = vunpack.c.l.b16 %v481
        %v1348 = vunpack.c.h.b16 %v481
        %v1349 = vunpack.c.l.b16 %v482
        %v1350 = vunpack.c.h.b16 %v482
        %v1351 = vunpack.c.l.b16 %v483
        %v1352 = vunpack.c.h.b16 %v483
        %v1353 = vunpack.c.l.b16 %v484
        %v1354 = vunpack.c.h.b16 %v484
        %v1355 = vunpack.c.l.b16 %v485
        %v1356 = vunpack.c.h.b16 %v485
        %v1357 = vunpack.c.l.b16 %v486
        %v1358 = vunpack.c.h.b16 %v486
        %v1359 = vunpack.c.l.b16 %v487
        %v1360 = vunpack.c.h.b16 %v487
        %v1361 = vunpack.c.l.b16 %v488
        %v1362 = vunpack.c.h.b16 %v488
        %v1363 = vunpack.c.l.b16 %v489
        %v1364 = vunpack.c.h.b16 %v489
        %v1365 = vunpack.c.l.b16 %v490
        %v1366 = vunpack.c.h.b16 %v490
        %v1367 = vunpack.c.l.b16 %v491
        %v1368 = vunpack.c.h.b16 %v491
        %v1369 = vunpack.c.l.b16 %v492
        %v1370 = vunpack.c.h.b16 %v492
        %v1371 = vunpack.c.l.b16 %v493
        %v1372 = vunpack.c.h.b16 %v493
        %v1373 = vunpack.c.l.b16 %v494
        %v1374 = vunpack.c.h.b16 %v494
        %v1375 = vunpack.c.l.b16 %v495
        %v1376 = vunpack.c.h.b16 %v495
        %v1377 = vunpack.c.l.b16 %v496
        %v1378 = vunpack.c.h.b16 %v496
        %v1379 = vunpack.c.l.b16 %v497
        %v1380 = vunpack.c.h.b16 %v497
        %v1381 = vunpack.c.l.b16 %v498
        %v1382 = vunpack.c.h.b16 %v498
        %v1383 = vunpack.c.l.b16 %v499
        %v1384 = vunpack.c.h.b16 %v499
        %v1385 = vunpack.c.l.b16 %v500
        %v1386 = vunpack.c.h.b16 %v500
        %v1387 = vunpack.c.l.b16 %v501
        %v1388 = vunpack.c.h.b16 %v501
        %v1389 = vunpack.c.l.b16 %v502
        %v1390 = vunpack.c.h.b16 %v502
        %v1391 = vunpack.c.l.b16 %v503
        %v1392 = vunpack.c.h.b16 %v503
        %v1393 = vunpack.c.l.b16 %v504
        %v1394 = vunpack.c.h.b16 %v504
        %v1395 = vpack.c.b16 %v1007, %v1003
        %v1396 = vpack.c.b16 %v1008, %v1004
        %v1397 = vpack.c.b16 %v1009, %v1005
        %v1398 = vpack.c.b16 %v1010, %v1006
        %v1399 = vpack.c.b16 %v1015, %v1011
        %v1400 = vpack.c.b16 %v1016, %v1012
        %v1401 = vpack.c.b16 %v1017, %v1013
        %v1402 = vpack.c.b16 %v1018, %v1014
        %v1403 = vpack.c.b16 %v1023, %v1019
        %v1404 = vpack.c.b16 %v1024, %v1020
        %v1405 = vpack.c.b16 %v1025, %v1021
        %v1406 = vpack.c.b16 %v1026, %v1022
        %v1407 = vpack.c.b16 %v1031, %v1027
        %v1408 = vpack.c.b16 %v1032, %v1028
        %v1409 = vpack.c.b16 %v1033, %v1029
        %v1410 = vpack.c.b16 %v1034, %v1030
        %v1411 = vpack.c.b16 %v1039, %v1035
        %v1412 = vpack.c.b16 %v1040, %v1036
        %v1413 = vpack.c.b16 %v1041, %v1037
        %v1414 = vpack.c.b16 %v1042, %v1038
        %v1415 = vpack.c.b16 %v1047, %v1043
        %v1416 = vpack.c.b16 %v1048, %v1044
        %v1417 = vpack.c.b16 %v1049, %v1045
        %v1418 = vpack.c.b16 %v1050, %v1046
        %v1419 = vpack.c.b16 %v1055, %v1051
        %v1420 = vpack.c.b16 %v1056, %v1052
        %v1421 = vpack.c.b16 %v1057, %v1053
        %v1422 = vpack.c.b16 %v1058, %v1054
        %v1423 = vpack.c.b16 %v1063, %v1059
        %v1424 = vpack.c.b16 %v1064, %v1060
        %v1425 = vpack.c.b16 %v1065, %v1061
        %v1426 = vpack.c.b16 %v1066, %v1062
        %v1427 = vpack.c.b16 %v1071, %v1067
        %v1428 = vpack.c.b16 %v1072, %v1068
        %v1429 = vpack.c.b16 %v1073, %v1069
        %v1430 = vpack.c.b16 %v1074, %v1070
        %v1431 = vpack.c.b16 %v1079, %v1075
        %v1432 = vpack.c.b16 %v1080, %v1076
        %v1433 = vpack.c.b16 %v1081, %v1077
        %v1434 = vpack.c.b16 %v1082, %v1078
        %v1435 = vpack.c.b16 %v1087, %v1083
        %v1436 = vpack.c.b16 %v1088, %v1084
        %v1437 = vpack.c.b16 %v1089, %v1085
        %v1438 = vpack.c.b16 %v1090, %v1086
        %v1439 = vpack.c.b16 %v1095, %v1091
        %v1440 = vpack.c.b16 %v1096, %v1092
        %v1441 = vpack.c.b16 %v1097, %v1093
        %v1442 = vpack.c.b16 %v1098, %v1094
        %v1443 = vpack.c.b16 %v1103, %v1099
        %v1444 = vpack.c.b16 %v1104, %v1100
        %v1445 = vpack.c.b16 %v1105, %v1101
        %v1446 = vpack.c.b16 %v1106, %v1102
        %v1447 = vpack.c.b16 %v1111, %v1107
        %v1448 = vpack.c.b16 %v1112, %v1108
        %v1449 = vpack.c.b16 %v1113, %v1109
        %v1450 = vpack.c.b16 %v1114, %v1110
        %v1451 = vpack.c.b16 %v1119, %v1115
        %v1452 = vpack.c.b16 %v1120, %v1116
        %v1453 = vpack.c.b16 %v1121, %v1117
        %v1454 = vpack.c.b16 %v1122, %v1118
        %v1455 = vpack.c.b16 %v1127, %v1123
        %v1456 = vpack.c.b16 %v1128, %v1124
        %v1457 = vpack.c.b16 %v1129, %v1125
        %v1458 = vpack.c.b16 %v1130, %v1126
        %v1459 = vpack.c.b16 %v1135, %v1131
        %v1460 = vpack.c.b16 %v1136, %v1132
        %v1461 = vpack.c.b16 %v1137, %v1133
        %v1462 = vpack.c.b16 %v1138, %v1134
        %v1463 = vpack.c.b16 %v1143, %v1139
        %v1464 = vpack.c.b16 %v1144, %v1140
        %v1465 = vpack.c.b16 %v1145, %v1141
        %v1466 = vpack.c.b16 %v1146, %v1142
        %v1467 = vpack.c.b16 %v1151, %v1147
        %v1468 = vpack.c.b16 %v1152, %v1148
        %v1469 = vpack.c.b16 %v1153, %v1149
        %v1470 = vpack.c.b16 %v1154, %v1150
        %v1471 = vpack.c.b16 %v1159, %v1155
        %v1472 = vpack.c.b16 %v1160, %v1156
        %v1473 = vpack.c.b16 %v1161, %v1157
        %v1474 = vpack.c.b16 %v1162, %v1158
        %v1475 = vpack.c.b16 %v1167, %v1163
        %v1476 = vpack.c.b16 %v1168, %v1164
        %v1477 = vpack.c.b16 %v1169, %v1165
        %v1478 = vpack.c.b16 %v1170, %v1166
        %v1479 = vpack.c.b16 %v1175, %v1171
        %v1480 = vpack.c.b16 %v1176, %v1172
        %v1481 = vpack.c.b16 %v1177, %v1173
        %v1482 = vpack.c.b16 %v1178, %v1174
        %v1483 = vpack.c.b16 %v1183, %v1179
        %v1484 = vpack.c.b16 %v1184, %v1180
        %v1485 = vpack.c.b16 %v1185, %v1181
        %v1486 = vpack.c.b16 %v1186, %v1182
        %v1487 = vpack.c.b16 %v1191, %v1187
        %v1488 = vpack.c.b16 %v1192, %v1188
        %v1489 = vpack.c.b16 %v1193, %v1189
        %v1490 = vpack.c.b16 %v1194, %v1190
        %v1491 = vpack.c.b16 %v1199, %v1195
        %v1492 = vpack.c.b16 %v1200, %v1196
        %v1493 = vpack.c.b16 %v1201, %v1197
        %v1494 = vpack.c.b16 %v1202, %v1198
        %v1495 = vpack.c.b16 %v1207, %v1203
        %v1496 = vpack.c.b16 %v1208, %v1204
        %v1497 = vpack.c.b16 %v1209, %v1205
        %v1498 = vpack.c.b16 %v1210, %v1206
        %v1499 = vpack.c.b16 %v1215, %v1211
        %v1500 = vpack.c.b16 %v1216, %v1212
        %v1501 = vpack.c.b16 %v1217, %v1213
        %v1502 = vpack.c.b16 %v1218, %v1214
        %v1503 = vpack.c.b16 %v1223, %v1219
        %v1504 = vpack.c.b16 %v1224, %v1220
        %v1505 = vpack.c.b16 %v1225, %v1221
        %v1506 = vpack.c.b16 %v1226, %v1222
        %v1507 = vpack.c.b16 %v1231, %v1227
        %v1508 = vpack.c.b16 %v1232, %v1228
        %v1509 = vpack.c.b16 %v1233, %v1229
        %v1510 = vpack.c.b16 %v1234, %v1230
        %v1511 = vpack.c.b16 %v1239, %v1235
        %v1512 = vpack.c.b16 %v1240, %v1236
        %v1513 = vpack.c.b16 %v1241, %v1237
        %v1514 = vpack.c.b16 %v1242, %v1238
        %v1515 = vpack.c.b16 %v1247, %v1243
        %v1516 = vpack.c.b16 %v1248, %v1244
        %v1517 = vpack.c.b16 %v1249, %v1245
        %v1518 = vpack.c.b16 %v1250, %v1246
        %v1519 = vpack.c.b16 %v1255, %v1251
        %v1520 = vpack.c.b16 %v1256, %v1252
        %v1521 = vpack.c.b16 %v1257, %v1253
        %v1522 = vpack.c.b16 %v1258, %v1254
        %v1523 = vpack.c.b16 %v1263, %v1259
        %v1524 = vpack.c.b16 %v1264, %v1260
        %v1525 = vpack.c.b16 %v1265, %v1261
        %v1526 = vpack.c.b16 %v1266, %v1262
        %v1527 = vpack.c.b16 %v1271, %v1267
        %v1528 = vpack.c.b16 %v1272, %v1268
        %v1529 = vpack.c.b16 %v1273, %v1269
        %v1530 = vpack.c.b16 %v1274, %v1270
        %v1531 = vpack.c.b16 %v1279, %v1275
        %v1532 = vpack.c.b16 %v1280, %v1276
        %v1533 = vpack.c.b16 %v1281, %v1277
        %v1534 = vpack.c.b16 %v1282, %v1278
        %v1535 = vpack.c.b16 %v1287, %v1283
        %v1536 = vpack.c.b16 %v1288, %v1284
        %v1537 = vpack.c.b16 %v1289, %v1285
        %v1538 = vpack.c.b16 %v1290, %v1286
        %v1539 = vpack.c.b16 %v1295, %v1291
        %v1540 = vpack.c.b16 %v1296, %v1292
        %v1541 = vpack.c.b16 %v1297, %v1293
        %v1542 = vpack.c.b16 %v1298, %v1294
        %v1543 = vpack.c.b16 %v1303, %v1299
        %v1544 = vpack.c.b16 %v1304, %v1300
        %v1545 = vpack.c.b16 %v1305, %v1301
        %v1546 = vpack.c.b16 %v1306, %v1302
        %v1547 = vpack.c.b16 %v1311, %v1307
        %v1548 = vpack.c.b16 %v1312, %v1308
        %v1549 = vpack.c.b16 %v1313, %v1309
        %v1550 = vpack.c.b16 %v1314, %v1310
        %v1551 = vpack.c.b16 %v1319, %v1315
        %v1552 = vpack.c.b16 %v1320, %v1316
        %v1553 = vpack.c.b16 %v1321, %v1317
        %v1554 = vpack.c.b16 %v1322, %v1318
        %v1555 = vpack.c.b16 %v1327, %v1323
        %v1556 = vpack.c.b16 %v1328, %v1324
        %v1557 = vpack.c.b16 %v1329, %v1325
        %v1558 = vpack.c.b16 %v1330, %v1326
        %v1559 = vpack.c.b16 %v1335, %v1331
        %v1560 = vpack.c.b16 %v1336, %v1332
        %v1561 = vpack.c.b16 %v1337, %v1333
        %v1562 = vpack.c.b16 %v1338, %v1334
        %v1563 = vpack.c.b16 %v1343, %v1339
        %v1564 = vpack.c.b16 %v1344, %v1340
        %v1565 = vpack.c.b16 %v1345, %v1341
        %v1566 = vpack.c.b16 %v1346, %v1342
        %v1567 = vpack.c.b16 %v1351, %v1347
        %v1568 = vpack.c.b16 %v1352, %v1348
        %v1569 = vpack.c.b16 %v1353, %v1349
        %v1570 = vpack.c.b16 %v1354, %v1350
        %v1571 = vpack.c.b16 %v1359, %v1355
        %v1572 = vpack.c.b16 %v1360, %v1356
        %v1573 = vpack.c.b16 %v1361, %v1357
        %v1574 = vpack.c.b16 %v1362, %v1358
        %v1575 = vpack.c.b16 %v1367, %v1363
        %v1576 = vpack.c.b16 %v1368, %v1364
        %v1577 = vpack.c.b16 %v1369, %v1365
        %v1578 = vpack.c.b16 %v1370, %v1366
        %v1579 = vpack.c.b16 %v1375, %v1371
        %v1580 = vpack.c.b16 %v1376, %v1372
        %v1581 = vpack.c.b16 %v1377, %v1373
        %v1582 = vpack.c.b16 %v1378, %v1374
        %v1583 = vpack.c.b16 %v1383, %v1379
        %v1584 = vpack.c.b16 %v1384, %v1380
        %v1585 = vpack.c.b16 %v1385, %v1381
        %v1586 = vpack.c.b16 %v1386, %v1382
        %v1587 = vpack.c.b16 %v1391, %v1387
        %v1588 = vpack.c.b16 %v1392, %v1388
        %v1589 = vpack.c.b16 %v1393, %v1389
        %v1590 = vpack.c.b16 %v1394, %v1390
        %vm1787 = vcmask 130048
        %v1789 = vsel %vm1787, %v709, 0
        %v1792 = vsel %vm1787, %v716, 0
        %v1795 = vsel %vm1787, %v723, 0
        %v1798 = vsel %vm1787, %v730, 0
        %v1801 = vsel %vm1787, %v737, 0
        %v1804 = vsel %vm1787, %v744, 0
        %v1807 = vsel %vm1787, %v751, 0
        %v1810 = vsel %vm1787, %v758, 0
        %1812 = vmatprep.subr.bf16.mxu0 %v1424
        %1813 = vmatpush1.bf16.msra.mxu0 %v1423
        %1814 = vmatprep.subr.bf16.mxu0 %v1420
        %1815 = vmatpush1.bf16.msra.mxu0 %v1419
        %1816 = vmatprep.subr.bf16.mxu0 %v1416
        %1817 = vmatpush1.bf16.msra.mxu0 %v1415
        %1818 = vmatprep.subr.bf16.mxu0 %v1412
        %1819 = vmatpush1.bf16.msra.mxu0 %v1411
        %1820 = vmatprep.subr.bf16.mxu0 %v1408
        %1821 = vmatpush1.bf16.msra.mxu0 %v1407
        %1822 = vmatprep.subr.bf16.mxu0 %v1404
        %1823 = vmatpush1.bf16.msra.mxu0 %v1403
        %1824 = vmatprep.subr.bf16.mxu0 %v1400
        %1825 = vmatpush1.bf16.msra.mxu0 %v1399
        %1826 = vmatprep.subr.bf16.mxu0 %v1396
        %1827 = vmatpush1.bf16.msra.mxu0 %v1395
        %1828 = vmatprep.subr.bf16.mxu0 %v1456
        %1829 = vmatpush2.bf16.msra.mxu0 %v1455
        %1830 = vmatprep.subr.bf16.mxu0 %v1452
        %1831 = vmatpush2.bf16.msra.mxu0 %v1451
        %1832 = vmatprep.subr.bf16.mxu0 %v1448
        %1833 = vmatpush2.bf16.msra.mxu0 %v1447
        %1834 = vmatprep.subr.bf16.mxu0 %v1444
        %1835 = vmatpush2.bf16.msra.mxu0 %v1443
        %1836 = vmatprep.subr.bf16.mxu0 %v1440
        %1837 = vmatpush2.bf16.msra.mxu0 %v1439
        %1838 = vmatprep.subr.bf16.mxu0 %v1436
        %1839 = vmatpush2.bf16.msra.mxu0 %v1435
        %1840 = vmatprep.subr.bf16.mxu0 %v1432
        %1841 = vmatpush2.bf16.msra.mxu0 %v1431
        %1842 = vmatprep.subr.bf16.mxu0 %v1428
        %1843 = vmatpush2.bf16.msra.mxu0 %v1427
        %1844 = vmatprep.mubr.bf16.mxu0 %v704
        %1845 = vmatmul.mubr.bf16.gmra.mxu0 %v703
        %v1846 = vpop.f32.mrf.mxu0
        %v1847 = vadd.f32 %v510, %v1846
        %v1848 = vpop.f32.mrf.mxu0
        %v1849 = vadd.f32 %v514, %v1848
        %v1850 = vpop.f32.mrf.mxu0
        %v1851 = vadd.f32 %v510, %v1850
        %v1852 = vpop.f32.mrf.mxu0
        %v1853 = vadd.f32 %v514, %v1852
        %1854 = vmatprep.mubr.bf16.mxu0 %v711
        %1855 = vmatmul.mubr.bf16.gmra.mxu0 %v710
        %v1856 = vpop.f32.mrf.mxu0
        %v1857 = vadd.f32 %v510, %v1856
        %v1858 = vpop.f32.mrf.mxu0
        %v1859 = vadd.f32 %v514, %v1858
        %v1860 = vpop.f32.mrf.mxu0
        %v1861 = vadd.f32 %v510, %v1860
        %v1862 = vpop.f32.mrf.mxu0
        %v1863 = vadd.f32 %v514, %v1862
        %1864 = vmatprep.mubr.bf16.mxu0 %v718
        %1865 = vmatmul.mubr.bf16.gmra.mxu0 %v717
        %v1866 = vpop.f32.mrf.mxu0
        %v1867 = vadd.f32 %v510, %v1866
        %v1868 = vpop.f32.mrf.mxu0
        %v1869 = vadd.f32 %v514, %v1868
        %v1870 = vpop.f32.mrf.mxu0
        %v1871 = vadd.f32 %v510, %v1870
        %v1872 = vpop.f32.mrf.mxu0
        %v1873 = vadd.f32 %v514, %v1872
        %1874 = vmatprep.mubr.bf16.mxu0 %v725
        %1875 = vmatmul.mubr.bf16.gmra.mxu0 %v724
        %v1876 = vpop.f32.mrf.mxu0
        %v1877 = vadd.f32 %v510, %v1876
        %v1878 = vpop.f32.mrf.mxu0
        %v1879 = vadd.f32 %v514, %v1878
        %v1880 = vpop.f32.mrf.mxu0
        %v1881 = vadd.f32 %v510, %v1880
        %v1882 = vpop.f32.mrf.mxu0
        %v1883 = vadd.f32 %v514, %v1882
        %1884 = vmatprep.mubr.bf16.mxu0 %v732
        %1885 = vmatmul.mubr.bf16.gmra.mxu0 %v731
        %v1886 = vpop.f32.mrf.mxu0
        %v1887 = vadd.f32 %v510, %v1886
        %v1888 = vpop.f32.mrf.mxu0
        %v1889 = vadd.f32 %v514, %v1888
        %v1890 = vpop.f32.mrf.mxu0
        %v1891 = vadd.f32 %v510, %v1890
        %v1892 = vpop.f32.mrf.mxu0
        %v1893 = vadd.f32 %v514, %v1892
        %1894 = vmatprep.mubr.bf16.mxu0 %v739
        %1895 = vmatmul.mubr.bf16.gmra.mxu0 %v738
        %v1896 = vpop.f32.mrf.mxu0
        %v1897 = vadd.f32 %v510, %v1896
        %v1898 = vpop.f32.mrf.mxu0
        %v1899 = vadd.f32 %v514, %v1898
        %v1900 = vpop.f32.mrf.mxu0
        %v1901 = vadd.f32 %v510, %v1900
        %v1902 = vpop.f32.mrf.mxu0
        %v1903 = vadd.f32 %v514, %v1902
        %1904 = vmatprep.mubr.bf16.mxu0 %v746
        %1905 = vmatmul.mubr.bf16.gmra.mxu0 %v745
        %v1906 = vpop.f32.mrf.mxu0
        %v1907 = vadd.f32 %v510, %v1906
        %v1908 = vpop.f32.mrf.mxu0
        %v1909 = vadd.f32 %v514, %v1908
        %v1910 = vpop.f32.mrf.mxu0
        %v1911 = vadd.f32 %v510, %v1910
        %v1912 = vpop.f32.mrf.mxu0
        %v1913 = vadd.f32 %v514, %v1912
        %1914 = vmatprep.mubr.bf16.mxu0 %v753
        %1915 = vmatmul.mubr.bf16.gmra.mxu0 %v752
        %v1916 = vpop.f32.mrf.mxu0
        %v1917 = vadd.f32 %v510, %v1916
        %v1918 = vpop.f32.mrf.mxu0
        %v1919 = vadd.f32 %v514, %v1918
        %v1920 = vpop.f32.mrf.mxu0
        %v1921 = vadd.f32 %v510, %v1920
        %v1922 = vpop.f32.mrf.mxu0
        %v1923 = vadd.f32 %v514, %v1922
        %1924 = vdwg.mxu0
        %1925 = vmatprep.subr.bf16.mxu0 %v1488
        %1926 = vmatpush1.bf16.msra.mxu0 %v1487
        %1927 = vmatprep.subr.bf16.mxu0 %v1484
        %1928 = vmatpush1.bf16.msra.mxu0 %v1483
        %1929 = vmatprep.subr.bf16.mxu0 %v1480
        %1930 = vmatpush1.bf16.msra.mxu0 %v1479
        %1931 = vmatprep.subr.bf16.mxu0 %v1476
        %1932 = vmatpush1.bf16.msra.mxu0 %v1475
        %1933 = vmatprep.subr.bf16.mxu0 %v1472
        %1934 = vmatpush1.bf16.msra.mxu0 %v1471
        %1935 = vmatprep.subr.bf16.mxu0 %v1468
        %1936 = vmatpush1.bf16.msra.mxu0 %v1467
        %1937 = vmatprep.subr.bf16.mxu0 %v1464
        %1938 = vmatpush1.bf16.msra.mxu0 %v1463
        %1939 = vmatprep.subr.bf16.mxu0 %v1460
        %1940 = vmatpush1.bf16.msra.mxu0 %v1459
        %1941 = vmatprep.subr.bf16.mxu0 %v1520
        %1942 = vmatpush2.bf16.msra.mxu0 %v1519
        %1943 = vmatprep.subr.bf16.mxu0 %v1516
        %1944 = vmatpush2.bf16.msra.mxu0 %v1515
        %1945 = vmatprep.subr.bf16.mxu0 %v1512
        %1946 = vmatpush2.bf16.msra.mxu0 %v1511
        %1947 = vmatprep.subr.bf16.mxu0 %v1508
        %1948 = vmatpush2.bf16.msra.mxu0 %v1507
        %1949 = vmatprep.subr.bf16.mxu0 %v1504
        %1950 = vmatpush2.bf16.msra.mxu0 %v1503
        %1951 = vmatprep.subr.bf16.mxu0 %v1500
        %1952 = vmatpush2.bf16.msra.mxu0 %v1499
        %1953 = vmatprep.subr.bf16.mxu0 %v1496
        %1954 = vmatpush2.bf16.msra.mxu0 %v1495
        %1955 = vmatprep.subr.bf16.mxu0 %v1492
        %1956 = vmatpush2.bf16.msra.mxu0 %v1491
        %1957 = vmatprep.mubr.bf16.mxu0 %v706
        %1958 = vmatmul.mubr.bf16.gmra.mxu0 %v705
        %v1959 = vpop.f32.mrf.mxu0
        %v1960 = vadd.f32 %v1847, %v1959
        %v1961 = vpop.f32.mrf.mxu0
        %v1962 = vadd.f32 %v1849, %v1961
        %v1963 = vpop.f32.mrf.mxu0
        %v1964 = vadd.f32 %v1851, %v1963
        %v1965 = vpop.f32.mrf.mxu0
        %v1966 = vadd.f32 %v1853, %v1965
        %1967 = vmatprep.mubr.bf16.mxu0 %v713
        %1968 = vmatmul.mubr.bf16.gmra.mxu0 %v712
        %v1969 = vpop.f32.mrf.mxu0
        %v1970 = vadd.f32 %v1857, %v1969
        %v1971 = vpop.f32.mrf.mxu0
        %v1972 = vadd.f32 %v1859, %v1971
        %v1973 = vpop.f32.mrf.mxu0
        %v1974 = vadd.f32 %v1861, %v1973
        %v1975 = vpop.f32.mrf.mxu0
        %v1976 = vadd.f32 %v1863, %v1975
        %1977 = vmatprep.mubr.bf16.mxu0 %v720
        %1978 = vmatmul.mubr.bf16.gmra.mxu0 %v719
        %v1979 = vpop.f32.mrf.mxu0
        %v1980 = vadd.f32 %v1867, %v1979
        %v1981 = vpop.f32.mrf.mxu0
        %v1982 = vadd.f32 %v1869, %v1981
        %v1983 = vpop.f32.mrf.mxu0
        %v1984 = vadd.f32 %v1871, %v1983
        %v1985 = vpop.f32.mrf.mxu0
        %v1986 = vadd.f32 %v1873, %v1985
        %1987 = vmatprep.mubr.bf16.mxu0 %v727
        %1988 = vmatmul.mubr.bf16.gmra.mxu0 %v726
        %v1989 = vpop.f32.mrf.mxu0
        %v1990 = vadd.f32 %v1877, %v1989
        %v1991 = vpop.f32.mrf.mxu0
        %v1992 = vadd.f32 %v1879, %v1991
        %v1993 = vpop.f32.mrf.mxu0
        %v1994 = vadd.f32 %v1881, %v1993
        %v1995 = vpop.f32.mrf.mxu0
        %v1996 = vadd.f32 %v1883, %v1995
        %1997 = vmatprep.mubr.bf16.mxu0 %v734
        %1998 = vmatmul.mubr.bf16.gmra.mxu0 %v733
        %v1999 = vpop.f32.mrf.mxu0
        %v2000 = vadd.f32 %v1887, %v1999
        %v2001 = vpop.f32.mrf.mxu0
        %v2002 = vadd.f32 %v1889, %v2001
        %v2003 = vpop.f32.mrf.mxu0
        %v2004 = vadd.f32 %v1891, %v2003
        %v2005 = vpop.f32.mrf.mxu0
        %v2006 = vadd.f32 %v1893, %v2005
        %2007 = vmatprep.mubr.bf16.mxu0 %v741
        %2008 = vmatmul.mubr.bf16.gmra.mxu0 %v740
        %v2009 = vpop.f32.mrf.mxu0
        %v2010 = vadd.f32 %v1897, %v2009
        %v2011 = vpop.f32.mrf.mxu0
        %v2012 = vadd.f32 %v1899, %v2011
        %v2013 = vpop.f32.mrf.mxu0
        %v2014 = vadd.f32 %v1901, %v2013
        %v2015 = vpop.f32.mrf.mxu0
        %v2016 = vadd.f32 %v1903, %v2015
        %2017 = vmatprep.mubr.bf16.mxu0 %v748
        %2018 = vmatmul.mubr.bf16.gmra.mxu0 %v747
        %v2019 = vpop.f32.mrf.mxu0
        %v2020 = vadd.f32 %v1907, %v2019
        %v2021 = vpop.f32.mrf.mxu0
        %v2022 = vadd.f32 %v1909, %v2021
        %v2023 = vpop.f32.mrf.mxu0
        %v2024 = vadd.f32 %v1911, %v2023
        %v2025 = vpop.f32.mrf.mxu0
        %v2026 = vadd.f32 %v1913, %v2025
        %2027 = vmatprep.mubr.bf16.mxu0 %v755
        %2028 = vmatmul.mubr.bf16.gmra.mxu0 %v754
        %v2029 = vpop.f32.mrf.mxu0
        %v2030 = vadd.f32 %v1917, %v2029
        %v2031 = vpop.f32.mrf.mxu0
        %v2032 = vadd.f32 %v1919, %v2031
        %v2033 = vpop.f32.mrf.mxu0
        %v2034 = vadd.f32 %v1921, %v2033
        %v2035 = vpop.f32.mrf.mxu0
        %v2036 = vadd.f32 %v1923, %v2035
        %2037 = vdwg.mxu0
        %2038 = vmatprep.subr.bf16.mxu0 %v1552
        %2039 = vmatpush1.bf16.msra.mxu0 %v1551
        %2040 = vmatprep.subr.bf16.mxu0 %v1548
        %2041 = vmatpush1.bf16.msra.mxu0 %v1547
        %2042 = vmatprep.subr.bf16.mxu0 %v1544
        %2043 = vmatpush1.bf16.msra.mxu0 %v1543
        %2044 = vmatprep.subr.bf16.mxu0 %v1540
        %2045 = vmatpush1.bf16.msra.mxu0 %v1539
        %2046 = vmatprep.subr.bf16.mxu0 %v1536
        %2047 = vmatpush1.bf16.msra.mxu0 %v1535
        %2048 = vmatprep.subr.bf16.mxu0 %v1532
        %2049 = vmatpush1.bf16.msra.mxu0 %v1531
        %2050 = vmatprep.subr.bf16.mxu0 %v1528
        %2051 = vmatpush1.bf16.msra.mxu0 %v1527
        %2052 = vmatprep.subr.bf16.mxu0 %v1524
        %2053 = vmatpush1.bf16.msra.mxu0 %v1523
        %2054 = vmatprep.subr.bf16.mxu0 %v1584
        %2055 = vmatpush2.bf16.msra.mxu0 %v1583
        %2056 = vmatprep.subr.bf16.mxu0 %v1580
        %2057 = vmatpush2.bf16.msra.mxu0 %v1579
        %2058 = vmatprep.subr.bf16.mxu0 %v1576
        %2059 = vmatpush2.bf16.msra.mxu0 %v1575
        %2060 = vmatprep.subr.bf16.mxu0 %v1572
        %2061 = vmatpush2.bf16.msra.mxu0 %v1571
        %2062 = vmatprep.subr.bf16.mxu0 %v1568
        %2063 = vmatpush2.bf16.msra.mxu0 %v1567
        %2064 = vmatprep.subr.bf16.mxu0 %v1564
        %2065 = vmatpush2.bf16.msra.mxu0 %v1563
        %2066 = vmatprep.subr.bf16.mxu0 %v1560
        %2067 = vmatpush2.bf16.msra.mxu0 %v1559
        %2068 = vmatprep.subr.bf16.mxu0 %v1556
        %2069 = vmatpush2.bf16.msra.mxu0 %v1555
        %2070 = vmatprep.mubr.bf16.mxu0 %v708
        %2071 = vmatmul.mubr.bf16.gmra.mxu0 %v707
        %v2072 = vpop.f32.mrf.mxu0
        %v2073 = vadd.f32 %v1960, %v2072
        %v2074 = vpop.f32.mrf.mxu0
        %v2075 = vadd.f32 %v1962, %v2074
        %v2076 = vpop.f32.mrf.mxu0
        %v2077 = vadd.f32 %v1964, %v2076
        %v2078 = vpop.f32.mrf.mxu0
        %v2079 = vadd.f32 %v1966, %v2078
        %2080 = vmatprep.mubr.bf16.mxu0 %v715
        %2081 = vmatmul.mubr.bf16.gmra.mxu0 %v714
        %v2082 = vpop.f32.mrf.mxu0
        %v2083 = vadd.f32 %v1970, %v2082
        %v2084 = vpop.f32.mrf.mxu0
        %v2085 = vadd.f32 %v1972, %v2084
        %v2086 = vpop.f32.mrf.mxu0
        %v2087 = vadd.f32 %v1974, %v2086
        %v2088 = vpop.f32.mrf.mxu0
        %v2089 = vadd.f32 %v1976, %v2088
        %2090 = vmatprep.mubr.bf16.mxu0 %v722
        %2091 = vmatmul.mubr.bf16.gmra.mxu0 %v721
        %v2092 = vpop.f32.mrf.mxu0
        %v2093 = vadd.f32 %v1980, %v2092
        %v2094 = vpop.f32.mrf.mxu0
        %v2095 = vadd.f32 %v1982, %v2094
        %v2096 = vpop.f32.mrf.mxu0
        %v2097 = vadd.f32 %v1984, %v2096
        %v2098 = vpop.f32.mrf.mxu0
        %v2099 = vadd.f32 %v1986, %v2098
        %2100 = vmatprep.mubr.bf16.mxu0 %v729
        %2101 = vmatmul.mubr.bf16.gmra.mxu0 %v728
        %v2102 = vpop.f32.mrf.mxu0
        %v2103 = vadd.f32 %v1990, %v2102
        %v2104 = vpop.f32.mrf.mxu0
        %v2105 = vadd.f32 %v1992, %v2104
        %v2106 = vpop.f32.mrf.mxu0
        %v2107 = vadd.f32 %v1994, %v2106
        %v2108 = vpop.f32.mrf.mxu0
        %v2109 = vadd.f32 %v1996, %v2108
        %2110 = vmatprep.mubr.bf16.mxu0 %v736
        %2111 = vmatmul.mubr.bf16.gmra.mxu0 %v735
        %v2112 = vpop.f32.mrf.mxu0
        %v2113 = vadd.f32 %v2000, %v2112
        %v2114 = vpop.f32.mrf.mxu0
        %v2115 = vadd.f32 %v2002, %v2114
        %v2116 = vpop.f32.mrf.mxu0
        %v2117 = vadd.f32 %v2004, %v2116
        %v2118 = vpop.f32.mrf.mxu0
        %v2119 = vadd.f32 %v2006, %v2118
        %2120 = vmatprep.mubr.bf16.mxu0 %v743
        %2121 = vmatmul.mubr.bf16.gmra.mxu0 %v742
        %v2122 = vpop.f32.mrf.mxu0
        %v2123 = vadd.f32 %v2010, %v2122
        %v2124 = vpop.f32.mrf.mxu0
        %v2125 = vadd.f32 %v2012, %v2124
        %v2126 = vpop.f32.mrf.mxu0
        %v2127 = vadd.f32 %v2014, %v2126
        %v2128 = vpop.f32.mrf.mxu0
        %v2129 = vadd.f32 %v2016, %v2128
        %2130 = vmatprep.mubr.bf16.mxu0 %v750
        %2131 = vmatmul.mubr.bf16.gmra.mxu0 %v749
        %v2132 = vpop.f32.mrf.mxu0
        %v2133 = vadd.f32 %v2020, %v2132
        %v2134 = vpop.f32.mrf.mxu0
        %v2135 = vadd.f32 %v2022, %v2134
        %v2136 = vpop.f32.mrf.mxu0
        %v2137 = vadd.f32 %v2024, %v2136
        %v2138 = vpop.f32.mrf.mxu0
        %v2139 = vadd.f32 %v2026, %v2138
        %2140 = vmatprep.mubr.bf16.mxu0 %v757
        %2141 = vmatmul.mubr.bf16.gmra.mxu0 %v756
        %v2142 = vpop.f32.mrf.mxu0
        %v2143 = vadd.f32 %v2030, %v2142
        %v2144 = vpop.f32.mrf.mxu0
        %v2145 = vadd.f32 %v2032, %v2144
        %v2146 = vpop.f32.mrf.mxu0
        %v2147 = vadd.f32 %v2034, %v2146
        %v2148 = vpop.f32.mrf.mxu0
        %v2149 = vadd.f32 %v2036, %v2148
        %2150 = vdwg.mxu0
        %2151 = vmatprep.subr.bf16.mxu0 0
        %2152 = vmatpush1.bf16.msra.mxu0 0
        %2153 = vmatprep.subr.bf16.mxu0 0
        %2154 = vmatpush1.bf16.msra.mxu0 0
        %2155 = vmatprep.subr.bf16.mxu0 0
        %2156 = vmatpush1.bf16.msra.mxu0 0
        %2157 = vmatprep.subr.bf16.mxu0 0
        %2158 = vmatpush1.bf16.msra.mxu0 0
        %2159 = vmatprep.subr.bf16.mxu0 0
        %2160 = vmatpush1.bf16.msra.mxu0 0
        %2161 = vmatprep.subr.bf16.mxu0 0
        %2162 = vmatpush1.bf16.msra.mxu0 0
        %2163 = vmatprep.subr.bf16.mxu0 0
        %2164 = vmatpush1.bf16.msra.mxu0 0
        %2165 = vmatprep.subr.bf16.mxu0 %v1588
        %2166 = vmatpush1.bf16.msra.mxu0 %v1587
        %2167 = vmatprep.subr.bf16.mxu0 0
        %2168 = vmatpush2.bf16.msra.mxu0 0
        %2169 = vmatprep.subr.bf16.mxu0 0
        %2170 = vmatpush2.bf16.msra.mxu0 0
        %2171 = vmatprep.subr.bf16.mxu0 0
        %2172 = vmatpush2.bf16.msra.mxu0 0
        %2173 = vmatprep.subr.bf16.mxu0 0
        %2174 = vmatpush2.bf16.msra.mxu0 0
        %2175 = vmatprep.subr.bf16.mxu0 0
        %2176 = vmatpush2.bf16.msra.mxu0 0
        %2177 = vmatprep.subr.bf16.mxu0 0
        %2178 = vmatpush2.bf16.msra.mxu0 0
        %2179 = vmatprep.subr.bf16.mxu0 0
        %2180 = vmatpush2.bf16.msra.mxu0 0
        %2181 = vmatprep.subr.bf16.mxu0 0
        %2182 = vmatpush2.bf16.msra.mxu0 0
        %2183 = vmatprep.mubr.bf16.mxu0 0
        %2184 = vmatmul.mubr.bf16.gmra.mxu0 %v1789
        %v2185 = vpop.f32.mrf.mxu0
        %v2186 = vadd.f32 %v2073, %v2185
        %v2187 = vpop.f32.mrf.mxu0
        %v2188 = vadd.f32 %v2075, %v2187
        %v2189 = vpop.f32.mrf.mxu0
        %v2190 = vadd.f32 %v2077, %v2189
        %v2191 = vpop.f32.mrf.mxu0
        %v2192 = vadd.f32 %v2079, %v2191
        %2193 = vmatprep.mubr.bf16.mxu0 0
        %2194 = vmatmul.mubr.bf16.gmra.mxu0 %v1792
        %v2195 = vpop.f32.mrf.mxu0
        %v2196 = vadd.f32 %v2083, %v2195
        %v2197 = vpop.f32.mrf.mxu0
        %v2198 = vadd.f32 %v2085, %v2197
        %v2199 = vpop.f32.mrf.mxu0
        %v2200 = vadd.f32 %v2087, %v2199
        %v2201 = vpop.f32.mrf.mxu0
        %v2202 = vadd.f32 %v2089, %v2201
        %2203 = vmatprep.mubr.bf16.mxu0 0
        %2204 = vmatmul.mubr.bf16.gmra.mxu0 %v1795
        %v2205 = vpop.f32.mrf.mxu0
        %v2206 = vadd.f32 %v2093, %v2205
        %v2207 = vpop.f32.mrf.mxu0
        %v2208 = vadd.f32 %v2095, %v2207
        %v2209 = vpop.f32.mrf.mxu0
        %v2210 = vadd.f32 %v2097, %v2209
        %v2211 = vpop.f32.mrf.mxu0
        %v2212 = vadd.f32 %v2099, %v2211
        %2213 = vmatprep.mubr.bf16.mxu0 0
        %2214 = vmatmul.mubr.bf16.gmra.mxu0 %v1798
        %v2215 = vpop.f32.mrf.mxu0
        %v2216 = vadd.f32 %v2103, %v2215
        %v2217 = vpop.f32.mrf.mxu0
        %v2218 = vadd.f32 %v2105, %v2217
        %v2219 = vpop.f32.mrf.mxu0
        %v2220 = vadd.f32 %v2107, %v2219
        %v2221 = vpop.f32.mrf.mxu0
        %v2222 = vadd.f32 %v2109, %v2221
        %2223 = vmatprep.mubr.bf16.mxu0 0
        %2224 = vmatmul.mubr.bf16.gmra.mxu0 %v1801
        %v2225 = vpop.f32.mrf.mxu0
        %v2226 = vadd.f32 %v2113, %v2225
        %v2227 = vpop.f32.mrf.mxu0
        %v2228 = vadd.f32 %v2115, %v2227
        %v2229 = vpop.f32.mrf.mxu0
        %v2230 = vadd.f32 %v2117, %v2229
        %v2231 = vpop.f32.mrf.mxu0
        %v2232 = vadd.f32 %v2119, %v2231
        %2233 = vmatprep.mubr.bf16.mxu0 0
        %2234 = vmatmul.mubr.bf16.gmra.mxu0 %v1804
        %v2235 = vpop.f32.mrf.mxu0
        %v2236 = vadd.f32 %v2123, %v2235
        %v2237 = vpop.f32.mrf.mxu0
        %v2238 = vadd.f32 %v2125, %v2237
        %v2239 = vpop.f32.mrf.mxu0
        %v2240 = vadd.f32 %v2127, %v2239
        %v2241 = vpop.f32.mrf.mxu0
        %v2242 = vadd.f32 %v2129, %v2241
        %2243 = vmatprep.mubr.bf16.mxu0 0
        %2244 = vmatmul.mubr.bf16.gmra.mxu0 %v1807
        %v2245 = vpop.f32.mrf.mxu0
        %v2246 = vadd.f32 %v2133, %v2245
        %v2247 = vpop.f32.mrf.mxu0
        %v2248 = vadd.f32 %v2135, %v2247
        %v2249 = vpop.f32.mrf.mxu0
        %v2250 = vadd.f32 %v2137, %v2249
        %v2251 = vpop.f32.mrf.mxu0
        %v2252 = vadd.f32 %v2139, %v2251
        %2253 = vmatprep.mubr.bf16.mxu0 0
        %2254 = vmatmul.mubr.bf16.gmra.mxu0 %v1810
        %v2255 = vpop.f32.mrf.mxu0
        %v2256 = vadd.f32 %v2143, %v2255
        %v2257 = vpop.f32.mrf.mxu0
        %v2258 = vadd.f32 %v2145, %v2257
        %v2259 = vpop.f32.mrf.mxu0
        %v2260 = vadd.f32 %v2147, %v2259
        %v2261 = vpop.f32.mrf.mxu0
        %v2262 = vadd.f32 %v2149, %v2261
        %2263 = vdwg.mxu0
        %2264 = vmatprep.subr.bf16.mxu0 %v1426
        %2265 = vmatpush1.bf16.msra.mxu0 %v1425
        %2266 = vmatprep.subr.bf16.mxu0 %v1422
        %2267 = vmatpush1.bf16.msra.mxu0 %v1421
        %2268 = vmatprep.subr.bf16.mxu0 %v1418
        %2269 = vmatpush1.bf16.msra.mxu0 %v1417
        %2270 = vmatprep.subr.bf16.mxu0 %v1414
        %2271 = vmatpush1.bf16.msra.mxu0 %v1413
        %2272 = vmatprep.subr.bf16.mxu0 %v1410
        %2273 = vmatpush1.bf16.msra.mxu0 %v1409
        %2274 = vmatprep.subr.bf16.mxu0 %v1406
        %2275 = vmatpush1.bf16.msra.mxu0 %v1405
        %2276 = vmatprep.subr.bf16.mxu0 %v1402
        %2277 = vmatpush1.bf16.msra.mxu0 %v1401
        %2278 = vmatprep.subr.bf16.mxu0 %v1398
        %2279 = vmatpush1.bf16.msra.mxu0 %v1397
        %2280 = vmatprep.subr.bf16.mxu0 %v1458
        %2281 = vmatpush2.bf16.msra.mxu0 %v1457
        %2282 = vmatprep.subr.bf16.mxu0 %v1454
        %2283 = vmatpush2.bf16.msra.mxu0 %v1453
        %2284 = vmatprep.subr.bf16.mxu0 %v1450
        %2285 = vmatpush2.bf16.msra.mxu0 %v1449
        %2286 = vmatprep.subr.bf16.mxu0 %v1446
        %2287 = vmatpush2.bf16.msra.mxu0 %v1445
        %2288 = vmatprep.subr.bf16.mxu0 %v1442
        %2289 = vmatpush2.bf16.msra.mxu0 %v1441
        %2290 = vmatprep.subr.bf16.mxu0 %v1438
        %2291 = vmatpush2.bf16.msra.mxu0 %v1437
        %2292 = vmatprep.subr.bf16.mxu0 %v1434
        %2293 = vmatpush2.bf16.msra.mxu0 %v1433
        %2294 = vmatprep.subr.bf16.mxu0 %v1430
        %2295 = vmatpush2.bf16.msra.mxu0 %v1429
        %2296 = vmatprep.mubr.bf16.mxu0 %v704
        %2297 = vmatmul.mubr.bf16.gmra.mxu0 %v703
        %v2298 = vpop.f32.mrf.mxu0
        %v2299 = vadd.f32 %v518, %v2298
        %v2300 = vpop.f32.mrf.mxu0
        %v2301 = vadd.f32 %v522, %v2300
        %v2302 = vpop.f32.mrf.mxu0
        %v2303 = vadd.f32 %v518, %v2302
        %v2304 = vpop.f32.mrf.mxu0
        %v2305 = vadd.f32 %v522, %v2304
        %2306 = vmatprep.mubr.bf16.mxu0 %v711
        %2307 = vmatmul.mubr.bf16.gmra.mxu0 %v710
        %v2308 = vpop.f32.mrf.mxu0
        %v2309 = vadd.f32 %v518, %v2308
        %v2310 = vpop.f32.mrf.mxu0
        %v2311 = vadd.f32 %v522, %v2310
        %v2312 = vpop.f32.mrf.mxu0
        %v2313 = vadd.f32 %v518, %v2312
        %v2314 = vpop.f32.mrf.mxu0
        %v2315 = vadd.f32 %v522, %v2314
        %2316 = vmatprep.mubr.bf16.mxu0 %v718
        %2317 = vmatmul.mubr.bf16.gmra.mxu0 %v717
        %v2318 = vpop.f32.mrf.mxu0
        %v2319 = vadd.f32 %v518, %v2318
        %v2320 = vpop.f32.mrf.mxu0
        %v2321 = vadd.f32 %v522, %v2320
        %v2322 = vpop.f32.mrf.mxu0
        %v2323 = vadd.f32 %v518, %v2322
        %v2324 = vpop.f32.mrf.mxu0
        %v2325 = vadd.f32 %v522, %v2324
        %2326 = vmatprep.mubr.bf16.mxu0 %v725
        %2327 = vmatmul.mubr.bf16.gmra.mxu0 %v724
        %v2328 = vpop.f32.mrf.mxu0
        %v2329 = vadd.f32 %v518, %v2328
        %v2330 = vpop.f32.mrf.mxu0
        %v2331 = vadd.f32 %v522, %v2330
        %v2332 = vpop.f32.mrf.mxu0
        %v2333 = vadd.f32 %v518, %v2332
        %v2334 = vpop.f32.mrf.mxu0
        %v2335 = vadd.f32 %v522, %v2334
        %2336 = vmatprep.mubr.bf16.mxu0 %v732
        %2337 = vmatmul.mubr.bf16.gmra.mxu0 %v731
        %v2338 = vpop.f32.mrf.mxu0
        %v2339 = vadd.f32 %v518, %v2338
        %v2340 = vpop.f32.mrf.mxu0
        %v2341 = vadd.f32 %v522, %v2340
        %v2342 = vpop.f32.mrf.mxu0
        %v2343 = vadd.f32 %v518, %v2342
        %v2344 = vpop.f32.mrf.mxu0
        %v2345 = vadd.f32 %v522, %v2344
        %2346 = vmatprep.mubr.bf16.mxu0 %v739
        %2347 = vmatmul.mubr.bf16.gmra.mxu0 %v738
        %v2348 = vpop.f32.mrf.mxu0
        %v2349 = vadd.f32 %v518, %v2348
        %v2350 = vpop.f32.mrf.mxu0
        %v2351 = vadd.f32 %v522, %v2350
        %v2352 = vpop.f32.mrf.mxu0
        %v2353 = vadd.f32 %v518, %v2352
        %v2354 = vpop.f32.mrf.mxu0
        %v2355 = vadd.f32 %v522, %v2354
        %2356 = vmatprep.mubr.bf16.mxu0 %v746
        %2357 = vmatmul.mubr.bf16.gmra.mxu0 %v745
        %v2358 = vpop.f32.mrf.mxu0
        %v2359 = vadd.f32 %v518, %v2358
        %v2360 = vpop.f32.mrf.mxu0
        %v2361 = vadd.f32 %v522, %v2360
        %v2362 = vpop.f32.mrf.mxu0
        %v2363 = vadd.f32 %v518, %v2362
        %v2364 = vpop.f32.mrf.mxu0
        %v2365 = vadd.f32 %v522, %v2364
        %2366 = vmatprep.mubr.bf16.mxu0 %v753
        %2367 = vmatmul.mubr.bf16.gmra.mxu0 %v752
        %v2368 = vpop.f32.mrf.mxu0
        %v2369 = vadd.f32 %v518, %v2368
        %v2370 = vpop.f32.mrf.mxu0
        %v2371 = vadd.f32 %v522, %v2370
        %v2372 = vpop.f32.mrf.mxu0
        %v2373 = vadd.f32 %v518, %v2372
        %v2374 = vpop.f32.mrf.mxu0
        %v2375 = vadd.f32 %v522, %v2374
        %2376 = vdwg.mxu0
        %2377 = vmatprep.subr.bf16.mxu0 %v1490
        %2378 = vmatpush1.bf16.msra.mxu0 %v1489
        %2379 = vmatprep.subr.bf16.mxu0 %v1486
        %2380 = vmatpush1.bf16.msra.mxu0 %v1485
        %2381 = vmatprep.subr.bf16.mxu0 %v1482
        %2382 = vmatpush1.bf16.msra.mxu0 %v1481
        %2383 = vmatprep.subr.bf16.mxu0 %v1478
        %2384 = vmatpush1.bf16.msra.mxu0 %v1477
        %2385 = vmatprep.subr.bf16.mxu0 %v1474
        %2386 = vmatpush1.bf16.msra.mxu0 %v1473
        %2387 = vmatprep.subr.bf16.mxu0 %v1470
        %2388 = vmatpush1.bf16.msra.mxu0 %v1469
        %2389 = vmatprep.subr.bf16.mxu0 %v1466
        %2390 = vmatpush1.bf16.msra.mxu0 %v1465
        %2391 = vmatprep.subr.bf16.mxu0 %v1462
        %2392 = vmatpush1.bf16.msra.mxu0 %v1461
        %2393 = vmatprep.subr.bf16.mxu0 %v1522
        %2394 = vmatpush2.bf16.msra.mxu0 %v1521
        %2395 = vmatprep.subr.bf16.mxu0 %v1518
        %2396 = vmatpush2.bf16.msra.mxu0 %v1517
        %2397 = vmatprep.subr.bf16.mxu0 %v1514
        %2398 = vmatpush2.bf16.msra.mxu0 %v1513
        %2399 = vmatprep.subr.bf16.mxu0 %v1510
        %2400 = vmatpush2.bf16.msra.mxu0 %v1509
        %2401 = vmatprep.subr.bf16.mxu0 %v1506
        %2402 = vmatpush2.bf16.msra.mxu0 %v1505
        %2403 = vmatprep.subr.bf16.mxu0 %v1502
        %2404 = vmatpush2.bf16.msra.mxu0 %v1501
        %2405 = vmatprep.subr.bf16.mxu0 %v1498
        %2406 = vmatpush2.bf16.msra.mxu0 %v1497
        %2407 = vmatprep.subr.bf16.mxu0 %v1494
        %2408 = vmatpush2.bf16.msra.mxu0 %v1493
        %2409 = vmatprep.mubr.bf16.mxu0 %v706
        %2410 = vmatmul.mubr.bf16.gmra.mxu0 %v705
        %v2411 = vpop.f32.mrf.mxu0
        %v2412 = vadd.f32 %v2299, %v2411
        %v2413 = vpop.f32.mrf.mxu0
        %v2414 = vadd.f32 %v2301, %v2413
        %v2415 = vpop.f32.mrf.mxu0
        %v2416 = vadd.f32 %v2303, %v2415
        %v2417 = vpop.f32.mrf.mxu0
        %v2418 = vadd.f32 %v2305, %v2417
        %2419 = vmatprep.mubr.bf16.mxu0 %v713
        %2420 = vmatmul.mubr.bf16.gmra.mxu0 %v712
        %v2421 = vpop.f32.mrf.mxu0
        %v2422 = vadd.f32 %v2309, %v2421
        %v2423 = vpop.f32.mrf.mxu0
        %v2424 = vadd.f32 %v2311, %v2423
        %v2425 = vpop.f32.mrf.mxu0
        %v2426 = vadd.f32 %v2313, %v2425
        %v2427 = vpop.f32.mrf.mxu0
        %v2428 = vadd.f32 %v2315, %v2427
        %2429 = vmatprep.mubr.bf16.mxu0 %v720
        %2430 = vmatmul.mubr.bf16.gmra.mxu0 %v719
        %v2431 = vpop.f32.mrf.mxu0
        %v2432 = vadd.f32 %v2319, %v2431
        %v2433 = vpop.f32.mrf.mxu0
        %v2434 = vadd.f32 %v2321, %v2433
        %v2435 = vpop.f32.mrf.mxu0
        %v2436 = vadd.f32 %v2323, %v2435
        %v2437 = vpop.f32.mrf.mxu0
        %v2438 = vadd.f32 %v2325, %v2437
        %2439 = vmatprep.mubr.bf16.mxu0 %v727
        %2440 = vmatmul.mubr.bf16.gmra.mxu0 %v726
        %v2441 = vpop.f32.mrf.mxu0
        %v2442 = vadd.f32 %v2329, %v2441
        %v2443 = vpop.f32.mrf.mxu0
        %v2444 = vadd.f32 %v2331, %v2443
        %v2445 = vpop.f32.mrf.mxu0
        %v2446 = vadd.f32 %v2333, %v2445
        %v2447 = vpop.f32.mrf.mxu0
        %v2448 = vadd.f32 %v2335, %v2447
        %2449 = vmatprep.mubr.bf16.mxu0 %v734
        %2450 = vmatmul.mubr.bf16.gmra.mxu0 %v733
        %v2451 = vpop.f32.mrf.mxu0
        %v2452 = vadd.f32 %v2339, %v2451
        %v2453 = vpop.f32.mrf.mxu0
        %v2454 = vadd.f32 %v2341, %v2453
        %v2455 = vpop.f32.mrf.mxu0
        %v2456 = vadd.f32 %v2343, %v2455
        %v2457 = vpop.f32.mrf.mxu0
        %v2458 = vadd.f32 %v2345, %v2457
        %2459 = vmatprep.mubr.bf16.mxu0 %v741
        %2460 = vmatmul.mubr.bf16.gmra.mxu0 %v740
        %v2461 = vpop.f32.mrf.mxu0
        %v2462 = vadd.f32 %v2349, %v2461
        %v2463 = vpop.f32.mrf.mxu0
        %v2464 = vadd.f32 %v2351, %v2463
        %v2465 = vpop.f32.mrf.mxu0
        %v2466 = vadd.f32 %v2353, %v2465
        %v2467 = vpop.f32.mrf.mxu0
        %v2468 = vadd.f32 %v2355, %v2467
        %2469 = vmatprep.mubr.bf16.mxu0 %v748
        %2470 = vmatmul.mubr.bf16.gmra.mxu0 %v747
        %v2471 = vpop.f32.mrf.mxu0
        %v2472 = vadd.f32 %v2359, %v2471
        %v2473 = vpop.f32.mrf.mxu0
        %v2474 = vadd.f32 %v2361, %v2473
        %v2475 = vpop.f32.mrf.mxu0
        %v2476 = vadd.f32 %v2363, %v2475
        %v2477 = vpop.f32.mrf.mxu0
        %v2478 = vadd.f32 %v2365, %v2477
        %2479 = vmatprep.mubr.bf16.mxu0 %v755
        %2480 = vmatmul.mubr.bf16.gmra.mxu0 %v754
        %v2481 = vpop.f32.mrf.mxu0
        %v2482 = vadd.f32 %v2369, %v2481
        %v2483 = vpop.f32.mrf.mxu0
        %v2484 = vadd.f32 %v2371, %v2483
        %v2485 = vpop.f32.mrf.mxu0
        %v2486 = vadd.f32 %v2373, %v2485
        %v2487 = vpop.f32.mrf.mxu0
        %v2488 = vadd.f32 %v2375, %v2487
        %2489 = vdwg.mxu0
        %2490 = vmatprep.subr.bf16.mxu0 %v1554
        %2491 = vmatpush1.bf16.msra.mxu0 %v1553
        %2492 = vmatprep.subr.bf16.mxu0 %v1550
        %2493 = vmatpush1.bf16.msra.mxu0 %v1549
        %2494 = vmatprep.subr.bf16.mxu0 %v1546
        %2495 = vmatpush1.bf16.msra.mxu0 %v1545
        %2496 = vmatprep.subr.bf16.mxu0 %v1542
        %2497 = vmatpush1.bf16.msra.mxu0 %v1541
        %2498 = vmatprep.subr.bf16.mxu0 %v1538
        %2499 = vmatpush1.bf16.msra.mxu0 %v1537
        %2500 = vmatprep.subr.bf16.mxu0 %v1534
        %2501 = vmatpush1.bf16.msra.mxu0 %v1533
        %2502 = vmatprep.subr.bf16.mxu0 %v1530
        %2503 = vmatpush1.bf16.msra.mxu0 %v1529
        %2504 = vmatprep.subr.bf16.mxu0 %v1526
        %2505 = vmatpush1.bf16.msra.mxu0 %v1525
        %2506 = vmatprep.subr.bf16.mxu0 %v1586
        %2507 = vmatpush2.bf16.msra.mxu0 %v1585
        %2508 = vmatprep.subr.bf16.mxu0 %v1582
        %2509 = vmatpush2.bf16.msra.mxu0 %v1581
        %2510 = vmatprep.subr.bf16.mxu0 %v1578
        %2511 = vmatpush2.bf16.msra.mxu0 %v1577
        %2512 = vmatprep.subr.bf16.mxu0 %v1574
        %2513 = vmatpush2.bf16.msra.mxu0 %v1573
        %2514 = vmatprep.subr.bf16.mxu0 %v1570
        %2515 = vmatpush2.bf16.msra.mxu0 %v1569
        %2516 = vmatprep.subr.bf16.mxu0 %v1566
        %2517 = vmatpush2.bf16.msra.mxu0 %v1565
        %2518 = vmatprep.subr.bf16.mxu0 %v1562
        %2519 = vmatpush2.bf16.msra.mxu0 %v1561
        %2520 = vmatprep.subr.bf16.mxu0 %v1558
        %2521 = vmatpush2.bf16.msra.mxu0 %v1557
        %2522 = vmatprep.mubr.bf16.mxu0 %v708
        %2523 = vmatmul.mubr.bf16.gmra.mxu0 %v707
        %v2524 = vpop.f32.mrf.mxu0
        %v2525 = vadd.f32 %v2412, %v2524
        %v2526 = vpop.f32.mrf.mxu0
        %v2527 = vadd.f32 %v2414, %v2526
        %v2528 = vpop.f32.mrf.mxu0
        %v2529 = vadd.f32 %v2416, %v2528
        %v2530 = vpop.f32.mrf.mxu0
        %v2531 = vadd.f32 %v2418, %v2530
        %2532 = vmatprep.mubr.bf16.mxu0 %v715
        %2533 = vmatmul.mubr.bf16.gmra.mxu0 %v714
        %v2534 = vpop.f32.mrf.mxu0
        %v2535 = vadd.f32 %v2422, %v2534
        %v2536 = vpop.f32.mrf.mxu0
        %v2537 = vadd.f32 %v2424, %v2536
        %v2538 = vpop.f32.mrf.mxu0
        %v2539 = vadd.f32 %v2426, %v2538
        %v2540 = vpop.f32.mrf.mxu0
        %v2541 = vadd.f32 %v2428, %v2540
        %2542 = vmatprep.mubr.bf16.mxu0 %v722
        %2543 = vmatmul.mubr.bf16.gmra.mxu0 %v721
        %v2544 = vpop.f32.mrf.mxu0
        %v2545 = vadd.f32 %v2432, %v2544
        %v2546 = vpop.f32.mrf.mxu0
        %v2547 = vadd.f32 %v2434, %v2546
        %v2548 = vpop.f32.mrf.mxu0
        %v2549 = vadd.f32 %v2436, %v2548
        %v2550 = vpop.f32.mrf.mxu0
        %v2551 = vadd.f32 %v2438, %v2550
        %2552 = vmatprep.mubr.bf16.mxu0 %v729
        %2553 = vmatmul.mubr.bf16.gmra.mxu0 %v728
        %v2554 = vpop.f32.mrf.mxu0
        %v2555 = vadd.f32 %v2442, %v2554
        %v2556 = vpop.f32.mrf.mxu0
        %v2557 = vadd.f32 %v2444, %v2556
        %v2558 = vpop.f32.mrf.mxu0
        %v2559 = vadd.f32 %v2446, %v2558
        %v2560 = vpop.f32.mrf.mxu0
        %v2561 = vadd.f32 %v2448, %v2560
        %2562 = vmatprep.mubr.bf16.mxu0 %v736
        %2563 = vmatmul.mubr.bf16.gmra.mxu0 %v735
        %v2564 = vpop.f32.mrf.mxu0
        %v2565 = vadd.f32 %v2452, %v2564
        %v2566 = vpop.f32.mrf.mxu0
        %v2567 = vadd.f32 %v2454, %v2566
        %v2568 = vpop.f32.mrf.mxu0
        %v2569 = vadd.f32 %v2456, %v2568
        %v2570 = vpop.f32.mrf.mxu0
        %v2571 = vadd.f32 %v2458, %v2570
        %2572 = vmatprep.mubr.bf16.mxu0 %v743
        %2573 = vmatmul.mubr.bf16.gmra.mxu0 %v742
        %v2574 = vpop.f32.mrf.mxu0
        %v2575 = vadd.f32 %v2462, %v2574
        %v2576 = vpop.f32.mrf.mxu0
        %v2577 = vadd.f32 %v2464, %v2576
        %v2578 = vpop.f32.mrf.mxu0
        %v2579 = vadd.f32 %v2466, %v2578
        %v2580 = vpop.f32.mrf.mxu0
        %v2581 = vadd.f32 %v2468, %v2580
        %2582 = vmatprep.mubr.bf16.mxu0 %v750
        %2583 = vmatmul.mubr.bf16.gmra.mxu0 %v749
        %v2584 = vpop.f32.mrf.mxu0
        %v2585 = vadd.f32 %v2472, %v2584
        %v2586 = vpop.f32.mrf.mxu0
        %v2587 = vadd.f32 %v2474, %v2586
        %v2588 = vpop.f32.mrf.mxu0
        %v2589 = vadd.f32 %v2476, %v2588
        %v2590 = vpop.f32.mrf.mxu0
        %v2591 = vadd.f32 %v2478, %v2590
        %2592 = vmatprep.mubr.bf16.mxu0 %v757
        %2593 = vmatmul.mubr.bf16.gmra.mxu0 %v756
        %v2594 = vpop.f32.mrf.mxu0
        %v2595 = vadd.f32 %v2482, %v2594
        %v2596 = vpop.f32.mrf.mxu0
        %v2597 = vadd.f32 %v2484, %v2596
        %v2598 = vpop.f32.mrf.mxu0
        %v2599 = vadd.f32 %v2486, %v2598
        %v2600 = vpop.f32.mrf.mxu0
        %v2601 = vadd.f32 %v2488, %v2600
        %2602 = vdwg.mxu0
        %2603 = vmatprep.subr.bf16.mxu0 0
        %2604 = vmatpush1.bf16.msra.mxu0 0
        %2605 = vmatprep.subr.bf16.mxu0 0
        %2606 = vmatpush1.bf16.msra.mxu0 0
        %2607 = vmatprep.subr.bf16.mxu0 0
        %2608 = vmatpush1.bf16.msra.mxu0 0
        %2609 = vmatprep.subr.bf16.mxu0 0
        %2610 = vmatpush1.bf16.msra.mxu0 0
        %2611 = vmatprep.subr.bf16.mxu0 0
        %2612 = vmatpush1.bf16.msra.mxu0 0
        %2613 = vmatprep.subr.bf16.mxu0 0
        %2614 = vmatpush1.bf16.msra.mxu0 0
        %2615 = vmatprep.subr.bf16.mxu0 0
        %2616 = vmatpush1.bf16.msra.mxu0 0
        %2617 = vmatprep.subr.bf16.mxu0 %v1590
        %2618 = vmatpush1.bf16.msra.mxu0 %v1589
        %2619 = vmatprep.subr.bf16.mxu0 0
        %2620 = vmatpush2.bf16.msra.mxu0 0
        %2621 = vmatprep.subr.bf16.mxu0 0
        %2622 = vmatpush2.bf16.msra.mxu0 0
        %2623 = vmatprep.subr.bf16.mxu0 0
        %2624 = vmatpush2.bf16.msra.mxu0 0
        %2625 = vmatprep.subr.bf16.mxu0 0
        %2626 = vmatpush2.bf16.msra.mxu0 0
        %2627 = vmatprep.subr.bf16.mxu0 0
        %2628 = vmatpush2.bf16.msra.mxu0 0
        %2629 = vmatprep.subr.bf16.mxu0 0
        %2630 = vmatpush2.bf16.msra.mxu0 0
        %2631 = vmatprep.subr.bf16.mxu0 0
        %2632 = vmatpush2.bf16.msra.mxu0 0
        %2633 = vmatprep.subr.bf16.mxu0 0
        %2634 = vmatpush2.bf16.msra.mxu0 0
        %2635 = vmatprep.mubr.bf16.mxu0 0
        %2636 = vmatmul.mubr.bf16.gmra.mxu0 %v1789
        %v2637 = vpop.f32.mrf.mxu0
        %v2638 = vadd.f32 %v2525, %v2637
        %v2639 = vpop.f32.mrf.mxu0
        %v2640 = vadd.f32 %v2527, %v2639
        %v2641 = vpop.f32.mrf.mxu0
        %v2642 = vadd.f32 %v2529, %v2641
        %v2643 = vpop.f32.mrf.mxu0
        %v2644 = vadd.f32 %v2531, %v2643
        %2645 = vmatprep.mubr.bf16.mxu0 0
        %2646 = vmatmul.mubr.bf16.gmra.mxu0 %v1792
        %v2647 = vpop.f32.mrf.mxu0
        %v2648 = vadd.f32 %v2535, %v2647
        %v2649 = vpop.f32.mrf.mxu0
        %v2650 = vadd.f32 %v2537, %v2649
        %v2651 = vpop.f32.mrf.mxu0
        %v2652 = vadd.f32 %v2539, %v2651
        %v2653 = vpop.f32.mrf.mxu0
        %v2654 = vadd.f32 %v2541, %v2653
        %2655 = vmatprep.mubr.bf16.mxu0 0
        %2656 = vmatmul.mubr.bf16.gmra.mxu0 %v1795
        %v2657 = vpop.f32.mrf.mxu0
        %v2658 = vadd.f32 %v2545, %v2657
        %v2659 = vpop.f32.mrf.mxu0
        %v2660 = vadd.f32 %v2547, %v2659
        %v2661 = vpop.f32.mrf.mxu0
        %v2662 = vadd.f32 %v2549, %v2661
        %v2663 = vpop.f32.mrf.mxu0
        %v2664 = vadd.f32 %v2551, %v2663
        %2665 = vmatprep.mubr.bf16.mxu0 0
        %2666 = vmatmul.mubr.bf16.gmra.mxu0 %v1798
        %v2667 = vpop.f32.mrf.mxu0
        %v2668 = vadd.f32 %v2555, %v2667
        %v2669 = vpop.f32.mrf.mxu0
        %v2670 = vadd.f32 %v2557, %v2669
        %v2671 = vpop.f32.mrf.mxu0
        %v2672 = vadd.f32 %v2559, %v2671
        %v2673 = vpop.f32.mrf.mxu0
        %v2674 = vadd.f32 %v2561, %v2673
        %2675 = vmatprep.mubr.bf16.mxu0 0
        %2676 = vmatmul.mubr.bf16.gmra.mxu0 %v1801
        %v2677 = vpop.f32.mrf.mxu0
        %v2678 = vadd.f32 %v2565, %v2677
        %v2679 = vpop.f32.mrf.mxu0
        %v2680 = vadd.f32 %v2567, %v2679
        %v2681 = vpop.f32.mrf.mxu0
        %v2682 = vadd.f32 %v2569, %v2681
        %v2683 = vpop.f32.mrf.mxu0
        %v2684 = vadd.f32 %v2571, %v2683
        %2685 = vmatprep.mubr.bf16.mxu0 0
        %2686 = vmatmul.mubr.bf16.gmra.mxu0 %v1804
        %v2687 = vpop.f32.mrf.mxu0
        %v2688 = vadd.f32 %v2575, %v2687
        %v2689 = vpop.f32.mrf.mxu0
        %v2690 = vadd.f32 %v2577, %v2689
        %v2691 = vpop.f32.mrf.mxu0
        %v2692 = vadd.f32 %v2579, %v2691
        %v2693 = vpop.f32.mrf.mxu0
        %v2694 = vadd.f32 %v2581, %v2693
        %2695 = vmatprep.mubr.bf16.mxu0 0
        %2696 = vmatmul.mubr.bf16.gmra.mxu0 %v1807
        %v2697 = vpop.f32.mrf.mxu0
        %v2698 = vadd.f32 %v2585, %v2697
        %v2699 = vpop.f32.mrf.mxu0
        %v2700 = vadd.f32 %v2587, %v2699
        %v2701 = vpop.f32.mrf.mxu0
        %v2702 = vadd.f32 %v2589, %v2701
        %v2703 = vpop.f32.mrf.mxu0
        %v2704 = vadd.f32 %v2591, %v2703
        %2705 = vmatprep.mubr.bf16.mxu0 0
        %2706 = vmatmul.mubr.bf16.gmra.mxu0 %v1810
        %v2707 = vpop.f32.mrf.mxu0
        %v2708 = vadd.f32 %v2595, %v2707
        %v2709 = vpop.f32.mrf.mxu0
        %v2710 = vadd.f32 %v2597, %v2709
        %v2711 = vpop.f32.mrf.mxu0
        %v2712 = vadd.f32 %v2599, %v2711
        %v2713 = vpop.f32.mrf.mxu0
        %v2714 = vadd.f32 %v2601, %v2713
        %2715 = vdwg.mxu0
        %v2716 = vmax.f32 %v2186, 0.0
        %v2717 = vmax.f32 %v2188, 0.0
        %v2718 = vmax.f32 %v2638, 0.0
        %v2719 = vmax.f32 %v2640, 0.0
        %v2720 = vmax.f32 %v2190, 0.0
        %v2721 = vmax.f32 %v2192, 0.0
        %v2722 = vmax.f32 %v2642, 0.0
        %v2723 = vmax.f32 %v2644, 0.0
        %v2724 = vmax.f32 %v2196, 0.0
        %v2725 = vmax.f32 %v2198, 0.0
        %v2726 = vmax.f32 %v2648, 0.0
        %v2727 = vmax.f32 %v2650, 0.0
        %v2728 = vmax.f32 %v2200, 0.0
        %v2729 = vmax.f32 %v2202, 0.0
        %v2730 = vmax.f32 %v2652, 0.0
        %v2731 = vmax.f32 %v2654, 0.0
        %v2732 = vmax.f32 %v2206, 0.0
        %v2733 = vmax.f32 %v2208, 0.0
        %v2734 = vmax.f32 %v2658, 0.0
        %v2735 = vmax.f32 %v2660, 0.0
        %v2736 = vmax.f32 %v2210, 0.0
        %v2737 = vmax.f32 %v2212, 0.0
        %v2738 = vmax.f32 %v2662, 0.0
        %v2739 = vmax.f32 %v2664, 0.0
        %v2740 = vmax.f32 %v2216, 0.0
        %v2741 = vmax.f32 %v2218, 0.0
        %v2742 = vmax.f32 %v2668, 0.0
        %v2743 = vmax.f32 %v2670, 0.0
        %v2744 = vmax.f32 %v2220, 0.0
        %v2745 = vmax.f32 %v2222, 0.0
        %v2746 = vmax.f32 %v2672, 0.0
        %v2747 = vmax.f32 %v2674, 0.0
        %v2748 = vmax.f32 %v2226, 0.0
        %v2749 = vmax.f32 %v2228, 0.0
        %v2750 = vmax.f32 %v2678, 0.0
        %v2751 = vmax.f32 %v2680, 0.0
        %v2752 = vmax.f32 %v2230, 0.0
        %v2753 = vmax.f32 %v2232, 0.0
        %v2754 = vmax.f32 %v2682, 0.0
        %v2755 = vmax.f32 %v2684, 0.0
        %v2756 = vmax.f32 %v2236, 0.0
        %v2757 = vmax.f32 %v2238, 0.0
        %v2758 = vmax.f32 %v2688, 0.0
        %v2759 = vmax.f32 %v2690, 0.0
        %v2760 = vmax.f32 %v2240, 0.0
        %v2761 = vmax.f32 %v2242, 0.0
        %v2762 = vmax.f32 %v2692, 0.0
        %v2763 = vmax.f32 %v2694, 0.0
        %v2764 = vmax.f32 %v2246, 0.0
        %v2765 = vmax.f32 %v2248, 0.0
        %v2766 = vmax.f32 %v2698, 0.0
        %v2767 = vmax.f32 %v2700, 0.0
        %v2768 = vmax.f32 %v2250, 0.0
        %v2769 = vmax.f32 %v2252, 0.0
        %v2770 = vmax.f32 %v2702, 0.0
        %v2771 = vmax.f32 %v2704, 0.0
        %v2772 = vmax.f32 %v2256, 0.0
        %v2773 = vmax.f32 %v2258, 0.0
        %v2774 = vmax.f32 %v2708, 0.0
        %v2775 = vmax.f32 %v2710, 0.0
        %v2776 = vmax.f32 %v2260, 0.0
        %v2777 = vmax.f32 %v2262, 0.0
        %v2778 = vmax.f32 %v2712, 0.0
        %v2779 = vmax.f32 %v2714, 0.0
        %v2780 = vpack.c.bf16 %v2720, %v2716
        %v2781 = vpack.c.bf16 %v2721, %v2717
        %v2782 = vpack.c.bf16 %v2722, %v2718
        %v2783 = vpack.c.bf16 %v2723, %v2719
        %v2784 = vpack.c.bf16 %v2728, %v2724
        %v2785 = vpack.c.bf16 %v2729, %v2725
        %v2786 = vpack.c.bf16 %v2730, %v2726
        %v2787 = vpack.c.bf16 %v2731, %v2727
        %v2788 = vpack.c.bf16 %v2736, %v2732
        %v2789 = vpack.c.bf16 %v2737, %v2733
        %v2790 = vpack.c.bf16 %v2738, %v2734
        %v2791 = vpack.c.bf16 %v2739, %v2735
        %v2792 = vpack.c.bf16 %v2744, %v2740
        %v2793 = vpack.c.bf16 %v2745, %v2741
        %v2794 = vpack.c.bf16 %v2746, %v2742
        %v2795 = vpack.c.bf16 %v2747, %v2743
        %v2796 = vpack.c.bf16 %v2752, %v2748
        %v2797 = vpack.c.bf16 %v2753, %v2749
        %v2798 = vpack.c.bf16 %v2754, %v2750
        %v2799 = vpack.c.bf16 %v2755, %v2751
        %v2800 = vpack.c.bf16 %v2760, %v2756
        %v2801 = vpack.c.bf16 %v2761, %v2757
        %v2802 = vpack.c.bf16 %v2762, %v2758
        %v2803 = vpack.c.bf16 %v2763, %v2759
        %v2804 = vpack.c.bf16 %v2768, %v2764
        %v2805 = vpack.c.bf16 %v2769, %v2765
        %v2806 = vpack.c.bf16 %v2770, %v2766
        %v2807 = vpack.c.bf16 %v2771, %v2767
        %v2808 = vpack.c.bf16 %v2776, %v2772
        %v2809 = vpack.c.bf16 %v2777, %v2773
        %v2810 = vpack.c.bf16 %v2778, %v2774
        %v2811 = vpack.c.bf16 %v2779, %v2775
        %v2812 = vld [vmem:[#allocation2] sm:$0xf]
        %v2813 = vld [vmem:[#allocation2 + $0x4] sm:$0xf]
        %v2814 = vld [vmem:[#allocation2 + $0x8] sm:$0xf]
        %v2815 = vld [vmem:[#allocation2 + $0xc] sm:$0xf]
        %v2816 = vld [vmem:[#allocation2 + $0x10] sm:$0xf]
        %v2817 = vld [vmem:[#allocation2 + $0x14] sm:$0xf]
        %v2818 = vld [vmem:[#allocation2 + $0x18] sm:$0xf]
        %v2819 = vld [vmem:[#allocation2 + $0x1c] sm:$0xf]
        %v2820 = vld [vmem:[#allocation2 + $0x20] sm:$0xf]
        %v2821 = vld [vmem:[#allocation2 + $0x24] sm:$0xf]
        %v2822 = vld [vmem:[#allocation2 + $0x28] sm:$0xf]
        %v2823 = vld [vmem:[#allocation2 + $0x2c] sm:$0xf]
        %v2824 = vld [vmem:[#allocation2 + $0x30] sm:$0xf]
        %v2825 = vld [vmem:[#allocation2 + $0x34] sm:$0xf]
        %v2826 = vld [vmem:[#allocation2 + $0x38] sm:$0xf]
        %v2827 = vld [vmem:[#allocation2 + $0x3c] sm:$0xf]
        %v2828 = vld [vmem:[#allocation2 + $0x40] sm:$0xf]
        %v2829 = vld [vmem:[#allocation2 + $0x44] sm:$0xf]
        %v2830 = vld [vmem:[#allocation2 + $0x48] sm:$0xf]
        %v2831 = vld [vmem:[#allocation2 + $0x4c] sm:$0xf]
        %v2832 = vld [vmem:[#allocation2 + $0x50] sm:$0xf]
        %v2833 = vld [vmem:[#allocation2 + $0x54] sm:$0xf]
        %v2834 = vld [vmem:[#allocation2 + $0x58] sm:$0xf]
        %v2835 = vld [vmem:[#allocation2 + $0x5c] sm:$0xf]
        %v2836 = vld [vmem:[#allocation2 + $0x60] sm:$0xf]
        %v2837 = vld [vmem:[#allocation2 + $0x64] sm:$0xf]
        %v2838 = vld [vmem:[#allocation2 + $0x68] sm:$0xf]
        %v2839 = vld [vmem:[#allocation2 + $0x6c] sm:$0xf]
        %v2840 = vld [vmem:[#allocation2 + $0x70] sm:$0xf]
        %v2841 = vld [vmem:[#allocation2 + $0x74] sm:$0xf]
        %v2842 = vld [vmem:[#allocation2 + $0x78] sm:$0xf]
        %v2843 = vld [vmem:[#allocation2 + $0x7c] sm:$0xf]
        %v2844 = vld [vmem:[#allocation2 + $0x80] sm:$0xf]
        %v2845 = vld [vmem:[#allocation2 + $0x84] sm:$0xf]
        %v2846 = vld [vmem:[#allocation2 + $0x88] sm:$0xf]
        %v2847 = vld [vmem:[#allocation2 + $0x8c] sm:$0xf]
        %v2848 = vld [vmem:[#allocation2 + $0x90] sm:$0xf]
        %v2849 = vld [vmem:[#allocation2 + $0x94] sm:$0xf]
        %v2850 = vld [vmem:[#allocation2 + $0x98] sm:$0xf]
        %v2851 = vld [vmem:[#allocation2 + $0x9c] sm:$0xf]
        %v2852 = vld [vmem:[#allocation2 + $0xa0] sm:$0xf]
        %v2853 = vld [vmem:[#allocation2 + $0xa4] sm:$0xf]
        %v2854 = vld [vmem:[#allocation2 + $0xa8] sm:$0xf]
        %v2855 = vld [vmem:[#allocation2 + $0xac] sm:$0xf]
        %v2856 = vld [vmem:[#allocation2 + $0xb0] sm:$0xf]
        %v2857 = vld [vmem:[#allocation2 + $0xb4] sm:$0xf]
        %v2858 = vld [vmem:[#allocation2 + $0xb8] sm:$0xf]
        %v2859 = vld [vmem:[#allocation2 + $0xbc] sm:$0xf]
        %v2860 = vld [vmem:[#allocation2 + $0xc0] sm:$0xf]
        %v2861 = vld [vmem:[#allocation2 + $0xc4] sm:$0xf]
        %v2862 = vld [vmem:[#allocation2 + $0xc8] sm:$0xf]
        %v2863 = vld [vmem:[#allocation2 + $0xcc] sm:$0xf]
        %v2864 = vld [vmem:[#allocation2 + $0xd0] sm:$0xf]
        %v2865 = vld [vmem:[#allocation2 + $0xd4] sm:$0xf]
        %v2866 = vld [vmem:[#allocation2 + $0xd8] sm:$0xf]
        %v2867 = vld [vmem:[#allocation2 + $0xdc] sm:$0xf]
        %v2868 = vld [vmem:[#allocation2 + $0xe0] sm:$0xf]
        %v2869 = vld [vmem:[#allocation2 + $0xe4] sm:$0xf]
        %v2870 = vld [vmem:[#allocation2 + $0xe8] sm:$0xf]
        %v2871 = vld [vmem:[#allocation2 + $0xec] sm:$0xf]
        %v2872 = vld [vmem:[#allocation2 + $0xf0] sm:$0xf]
        %v2873 = vld [vmem:[#allocation2 + $0xf4] sm:$0xf]
        %v2874 = vld [vmem:[#allocation2 + $0xf8] sm:$0xf]
        %v2875 = vld [vmem:[#allocation2 + $0xfc] sm:$0xf]
        %v2876 = vld [vmem:[%s4] sm:$0x1]
        %v2878 = vlaneseq
        %v2879 = vshrl.u32 %v2878, 7
        %v2880 = vsub.s32 0, %v2879
        %v2881 = vrot.slane %v2876, %v2880
        %v2947 = vunpack.c.l.b16 %v2812
        %v2948 = vunpack.c.l.b16 %v2813
        %v2949 = vunpack.c.l.b16 %v2814
        %v2950 = vunpack.c.l.b16 %v2815
        %v2951 = vunpack.c.l.b16 %v2816
        %v2952 = vunpack.c.l.b16 %v2817
        %v2953 = vunpack.c.l.b16 %v2818
        %v2954 = vunpack.c.l.b16 %v2819
        %v2955 = vunpack.c.l.b16 %v2820
        %v2956 = vunpack.c.l.b16 %v2821
        %v2957 = vunpack.c.l.b16 %v2822
        %v2958 = vunpack.c.l.b16 %v2823
        %v2959 = vunpack.c.l.b16 %v2824
        %v2960 = vunpack.c.l.b16 %v2825
        %v2961 = vunpack.c.l.b16 %v2826
        %v2962 = vunpack.c.l.b16 %v2827
        %v2963 = vunpack.c.l.b16 %v2828
        %v2964 = vunpack.c.l.b16 %v2829
        %v2965 = vunpack.c.l.b16 %v2830
        %v2966 = vunpack.c.l.b16 %v2831
        %v2967 = vunpack.c.l.b16 %v2832
        %v2968 = vunpack.c.l.b16 %v2833
        %v2969 = vunpack.c.l.b16 %v2834
        %v2970 = vunpack.c.l.b16 %v2835
        %v2971 = vunpack.c.l.b16 %v2836
        %v2972 = vunpack.c.l.b16 %v2837
        %v2973 = vunpack.c.l.b16 %v2838
        %v2974 = vunpack.c.l.b16 %v2839
        %v2975 = vunpack.c.l.b16 %v2840
        %v2976 = vunpack.c.l.b16 %v2841
        %v2977 = vunpack.c.l.b16 %v2842
        %v2978 = vunpack.c.l.b16 %v2843
        %v2979 = vunpack.c.l.b16 %v2844
        %v2980 = vunpack.c.l.b16 %v2845
        %v2981 = vunpack.c.l.b16 %v2846
        %v2982 = vunpack.c.l.b16 %v2847
        %v2983 = vunpack.c.l.b16 %v2848
        %v2984 = vunpack.c.l.b16 %v2849
        %v2985 = vunpack.c.l.b16 %v2850
        %v2986 = vunpack.c.l.b16 %v2851
        %v2987 = vunpack.c.l.b16 %v2852
        %v2988 = vunpack.c.l.b16 %v2853
        %v2989 = vunpack.c.l.b16 %v2854
        %v2990 = vunpack.c.l.b16 %v2855
        %v2991 = vunpack.c.l.b16 %v2856
        %v2992 = vunpack.c.l.b16 %v2857
        %v2993 = vunpack.c.l.b16 %v2858
        %v2994 = vunpack.c.l.b16 %v2859
        %v2995 = vunpack.c.l.b16 %v2860
        %v2996 = vunpack.c.l.b16 %v2861
        %v2997 = vunpack.c.l.b16 %v2862
        %v2998 = vunpack.c.l.b16 %v2863
        %v2999 = vunpack.c.l.b16 %v2864
        %v3000 = vunpack.c.l.b16 %v2865
        %v3001 = vunpack.c.l.b16 %v2866
        %v3002 = vunpack.c.l.b16 %v2867
        %v3003 = vunpack.c.l.b16 %v2868
        %v3004 = vunpack.c.l.b16 %v2869
        %v3005 = vunpack.c.l.b16 %v2870
        %v3006 = vunpack.c.l.b16 %v2871
        %v3007 = vunpack.c.l.b16 %v2872
        %v3008 = vunpack.c.l.b16 %v2873
        %v3009 = vunpack.c.l.b16 %v2874
        %v3010 = vunpack.c.l.b16 %v2875
        %v3011 = vpack.c.b16 %v2948, %v2947
        %v3012 = vpack.c.b16 %v2950, %v2949
        %v3013 = vpack.c.b16 %v2952, %v2951
        %v3014 = vpack.c.b16 %v2954, %v2953
        %v3015 = vpack.c.b16 %v2956, %v2955
        %v3016 = vpack.c.b16 %v2958, %v2957
        %v3017 = vpack.c.b16 %v2960, %v2959
        %v3018 = vpack.c.b16 %v2962, %v2961
        %v3019 = vpack.c.b16 %v2964, %v2963
        %v3020 = vpack.c.b16 %v2966, %v2965
        %v3021 = vpack.c.b16 %v2968, %v2967
        %v3022 = vpack.c.b16 %v2970, %v2969
        %v3023 = vpack.c.b16 %v2972, %v2971
        %v3024 = vpack.c.b16 %v2974, %v2973
        %v3025 = vpack.c.b16 %v2976, %v2975
        %v3026 = vpack.c.b16 %v2978, %v2977
        %v3027 = vpack.c.b16 %v2980, %v2979
        %v3028 = vpack.c.b16 %v2982, %v2981
        %v3029 = vpack.c.b16 %v2984, %v2983
        %v3030 = vpack.c.b16 %v2986, %v2985
        %v3031 = vpack.c.b16 %v2988, %v2987
        %v3032 = vpack.c.b16 %v2990, %v2989
        %v3033 = vpack.c.b16 %v2992, %v2991
        %v3034 = vpack.c.b16 %v2994, %v2993
        %v3035 = vpack.c.b16 %v2996, %v2995
        %v3036 = vpack.c.b16 %v2998, %v2997
        %v3037 = vpack.c.b16 %v3000, %v2999
        %v3038 = vpack.c.b16 %v3002, %v3001
        %v3039 = vpack.c.b16 %v3004, %v3003
        %v3040 = vpack.c.b16 %v3006, %v3005
        %v3041 = vpack.c.b16 %v3008, %v3007
        %v3042 = vpack.c.b16 %v3010, %v3009
        %3075 = vmatprep.subr.bf16.mxu0 0
        %3076 = vmatpush1.bf16.msra.mxu0 %v3018
        %3077 = vmatprep.subr.bf16.mxu0 0
        %3078 = vmatpush1.bf16.msra.mxu0 %v3017
        %3079 = vmatprep.subr.bf16.mxu0 0
        %3080 = vmatpush1.bf16.msra.mxu0 %v3016
        %3081 = vmatprep.subr.bf16.mxu0 0
        %3082 = vmatpush1.bf16.msra.mxu0 %v3015
        %3083 = vmatprep.subr.bf16.mxu0 0
        %3084 = vmatpush1.bf16.msra.mxu0 %v3014
        %3085 = vmatprep.subr.bf16.mxu0 0
        %3086 = vmatpush1.bf16.msra.mxu0 %v3013
        %3087 = vmatprep.subr.bf16.mxu0 0
        %3088 = vmatpush1.bf16.msra.mxu0 %v3012
        %3089 = vmatprep.subr.bf16.mxu0 0
        %3090 = vmatpush1.bf16.msra.mxu0 %v3011
        %3091 = vmatprep.subr.bf16.mxu0 0
        %3092 = vmatpush2.bf16.msra.mxu0 %v3026
        %3093 = vmatprep.subr.bf16.mxu0 0
        %3094 = vmatpush2.bf16.msra.mxu0 %v3025
        %3095 = vmatprep.subr.bf16.mxu0 0
        %3096 = vmatpush2.bf16.msra.mxu0 %v3024
        %3097 = vmatprep.subr.bf16.mxu0 0
        %3098 = vmatpush2.bf16.msra.mxu0 %v3023
        %3099 = vmatprep.subr.bf16.mxu0 0
        %3100 = vmatpush2.bf16.msra.mxu0 %v3022
        %3101 = vmatprep.subr.bf16.mxu0 0
        %3102 = vmatpush2.bf16.msra.mxu0 %v3021
        %3103 = vmatprep.subr.bf16.mxu0 0
        %3104 = vmatpush2.bf16.msra.mxu0 %v3020
        %3105 = vmatprep.subr.bf16.mxu0 0
        %3106 = vmatpush2.bf16.msra.mxu0 %v3019
        %3107 = vmatprep.mubr.bf16.mxu0 %v2781
        %3108 = vmatmul.mubr.bf16.gmra.mxu0 %v2780
        %v3109 = vpop.f32.mrf.mxu0
        %v3110 = vadd.f32 %v2881, %v3109
        %v3111 = vpop.f32.mrf.mxu0
        %v3112 = vpop.f32.mrf.mxu0
        %v3113 = vadd.f32 %v2881, %v3112
        %v3114 = vpop.f32.mrf.mxu0
        %3115 = vmatprep.mubr.bf16.mxu0 %v2785
        %3116 = vmatmul.mubr.bf16.gmra.mxu0 %v2784
        %v3117 = vpop.f32.mrf.mxu0
        %v3118 = vadd.f32 %v2881, %v3117
        %v3119 = vpop.f32.mrf.mxu0
        %v3120 = vpop.f32.mrf.mxu0
        %v3121 = vadd.f32 %v2881, %v3120
        %v3122 = vpop.f32.mrf.mxu0
        %3123 = vmatprep.mubr.bf16.mxu0 %v2789
        %3124 = vmatmul.mubr.bf16.gmra.mxu0 %v2788
        %v3125 = vpop.f32.mrf.mxu0
        %v3126 = vadd.f32 %v2881, %v3125
        %v3127 = vpop.f32.mrf.mxu0
        %v3128 = vpop.f32.mrf.mxu0
        %v3129 = vadd.f32 %v2881, %v3128
        %v3130 = vpop.f32.mrf.mxu0
        %3131 = vmatprep.mubr.bf16.mxu0 %v2793
        %3132 = vmatmul.mubr.bf16.gmra.mxu0 %v2792
        %v3133 = vpop.f32.mrf.mxu0
        %v3134 = vadd.f32 %v2881, %v3133
        %v3135 = vpop.f32.mrf.mxu0
        %v3136 = vpop.f32.mrf.mxu0
        %v3137 = vadd.f32 %v2881, %v3136
        %v3138 = vpop.f32.mrf.mxu0
        %3139 = vmatprep.mubr.bf16.mxu0 %v2797
        %3140 = vmatmul.mubr.bf16.gmra.mxu0 %v2796
        %v3141 = vpop.f32.mrf.mxu0
        %v3142 = vadd.f32 %v2881, %v3141
        %v3143 = vpop.f32.mrf.mxu0
        %v3144 = vpop.f32.mrf.mxu0
        %v3145 = vadd.f32 %v2881, %v3144
        %v3146 = vpop.f32.mrf.mxu0
        %3147 = vmatprep.mubr.bf16.mxu0 %v2801
        %3148 = vmatmul.mubr.bf16.gmra.mxu0 %v2800
        %v3149 = vpop.f32.mrf.mxu0
        %v3150 = vadd.f32 %v2881, %v3149
        %v3151 = vpop.f32.mrf.mxu0
        %v3152 = vpop.f32.mrf.mxu0
        %v3153 = vadd.f32 %v2881, %v3152
        %v3154 = vpop.f32.mrf.mxu0
        %3155 = vmatprep.mubr.bf16.mxu0 %v2805
        %3156 = vmatmul.mubr.bf16.gmra.mxu0 %v2804
        %v3157 = vpop.f32.mrf.mxu0
        %v3158 = vadd.f32 %v2881, %v3157
        %v3159 = vpop.f32.mrf.mxu0
        %v3160 = vpop.f32.mrf.mxu0
        %v3161 = vadd.f32 %v2881, %v3160
        %v3162 = vpop.f32.mrf.mxu0
        %3163 = vmatprep.mubr.bf16.mxu0 %v2809
        %3164 = vmatmul.mubr.bf16.gmra.mxu0 %v2808
        %v3165 = vpop.f32.mrf.mxu0
        %v3166 = vadd.f32 %v2881, %v3165
        %v3167 = vpop.f32.mrf.mxu0
        %v3168 = vpop.f32.mrf.mxu0
        %v3169 = vadd.f32 %v2881, %v3168
        %v3170 = vpop.f32.mrf.mxu0
        %3171 = vdwg.mxu0
        %3172 = vmatprep.subr.bf16.mxu0 0
        %3173 = vmatpush1.bf16.msra.mxu0 %v3034
        %3174 = vmatprep.subr.bf16.mxu0 0
        %3175 = vmatpush1.bf16.msra.mxu0 %v3033
        %3176 = vmatprep.subr.bf16.mxu0 0
        %3177 = vmatpush1.bf16.msra.mxu0 %v3032
        %3178 = vmatprep.subr.bf16.mxu0 0
        %3179 = vmatpush1.bf16.msra.mxu0 %v3031
        %3180 = vmatprep.subr.bf16.mxu0 0
        %3181 = vmatpush1.bf16.msra.mxu0 %v3030
        %3182 = vmatprep.subr.bf16.mxu0 0
        %3183 = vmatpush1.bf16.msra.mxu0 %v3029
        %3184 = vmatprep.subr.bf16.mxu0 0
        %3185 = vmatpush1.bf16.msra.mxu0 %v3028
        %3186 = vmatprep.subr.bf16.mxu0 0
        %3187 = vmatpush1.bf16.msra.mxu0 %v3027
        %3188 = vmatprep.subr.bf16.mxu0 0
        %3189 = vmatpush2.bf16.msra.mxu0 %v3042
        %3190 = vmatprep.subr.bf16.mxu0 0
        %3191 = vmatpush2.bf16.msra.mxu0 %v3041
        %3192 = vmatprep.subr.bf16.mxu0 0
        %3193 = vmatpush2.bf16.msra.mxu0 %v3040
        %3194 = vmatprep.subr.bf16.mxu0 0
        %3195 = vmatpush2.bf16.msra.mxu0 %v3039
        %3196 = vmatprep.subr.bf16.mxu0 0
        %3197 = vmatpush2.bf16.msra.mxu0 %v3038
        %3198 = vmatprep.subr.bf16.mxu0 0
        %3199 = vmatpush2.bf16.msra.mxu0 %v3037
        %3200 = vmatprep.subr.bf16.mxu0 0
        %3201 = vmatpush2.bf16.msra.mxu0 %v3036
        %3202 = vmatprep.subr.bf16.mxu0 0
        %3203 = vmatpush2.bf16.msra.mxu0 %v3035
        %3204 = vmatprep.mubr.bf16.mxu0 %v2783
        %3205 = vmatmul.mubr.bf16.gmra.mxu0 %v2782
        %v3206 = vpop.f32.mrf.mxu0
        %v3207 = vadd.f32 %v3110, %v3206
        %v3208 = vpop.f32.mrf.mxu0
        %v3209 = vpop.f32.mrf.mxu0
        %v3210 = vadd.f32 %v3113, %v3209
        %v3211 = vpop.f32.mrf.mxu0
        %3212 = vmatprep.mubr.bf16.mxu0 %v2787
        %3213 = vmatmul.mubr.bf16.gmra.mxu0 %v2786
        %v3214 = vpop.f32.mrf.mxu0
        %v3215 = vadd.f32 %v3118, %v3214
        %v3216 = vpop.f32.mrf.mxu0
        %v3217 = vpop.f32.mrf.mxu0
        %v3218 = vadd.f32 %v3121, %v3217
        %v3219 = vpop.f32.mrf.mxu0
        %3220 = vmatprep.mubr.bf16.mxu0 %v2791
        %3221 = vmatmul.mubr.bf16.gmra.mxu0 %v2790
        %v3222 = vpop.f32.mrf.mxu0
        %v3223 = vadd.f32 %v3126, %v3222
        %v3224 = vpop.f32.mrf.mxu0
        %v3225 = vpop.f32.mrf.mxu0
        %v3226 = vadd.f32 %v3129, %v3225
        %v3227 = vpop.f32.mrf.mxu0
        %3228 = vmatprep.mubr.bf16.mxu0 %v2795
        %3229 = vmatmul.mubr.bf16.gmra.mxu0 %v2794
        %v3230 = vpop.f32.mrf.mxu0
        %v3231 = vadd.f32 %v3134, %v3230
        %v3232 = vpop.f32.mrf.mxu0
        %v3233 = vpop.f32.mrf.mxu0
        %v3234 = vadd.f32 %v3137, %v3233
        %v3235 = vpop.f32.mrf.mxu0
        %3236 = vmatprep.mubr.bf16.mxu0 %v2799
        %3237 = vmatmul.mubr.bf16.gmra.mxu0 %v2798
        %v3238 = vpop.f32.mrf.mxu0
        %v3239 = vadd.f32 %v3142, %v3238
        %v3240 = vpop.f32.mrf.mxu0
        %v3241 = vpop.f32.mrf.mxu0
        %v3242 = vadd.f32 %v3145, %v3241
        %v3243 = vpop.f32.mrf.mxu0
        %3244 = vmatprep.mubr.bf16.mxu0 %v2803
        %3245 = vmatmul.mubr.bf16.gmra.mxu0 %v2802
        %v3246 = vpop.f32.mrf.mxu0
        %v3247 = vadd.f32 %v3150, %v3246
        %v3248 = vpop.f32.mrf.mxu0
        %v3249 = vpop.f32.mrf.mxu0
        %v3250 = vadd.f32 %v3153, %v3249
        %v3251 = vpop.f32.mrf.mxu0
        %3252 = vmatprep.mubr.bf16.mxu0 %v2807
        %3253 = vmatmul.mubr.bf16.gmra.mxu0 %v2806
        %v3254 = vpop.f32.mrf.mxu0
        %v3255 = vadd.f32 %v3158, %v3254
        %v3256 = vpop.f32.mrf.mxu0
        %v3257 = vpop.f32.mrf.mxu0
        %v3258 = vadd.f32 %v3161, %v3257
        %v3259 = vpop.f32.mrf.mxu0
        %3260 = vmatprep.mubr.bf16.mxu0 %v2811
        %3261 = vmatmul.mubr.bf16.gmra.mxu0 %v2810
        %v3262 = vpop.f32.mrf.mxu0
        %v3263 = vadd.f32 %v3166, %v3262
        %v3264 = vpop.f32.mrf.mxu0
        %v3265 = vpop.f32.mrf.mxu0
        %v3266 = vadd.f32 %v3169, %v3265
        %v3267 = vpop.f32.mrf.mxu0
        %3268 = vdwg.mxu0
        %3269 = vst [vmem:[%s235] sm:$0xff] %v3207
        %3270 = vst [vmem:[%s235 + $0x8] sm:$0xff] %v3210
        %3271 = vst [vmem:[%s235 + $0x10] sm:$0xff] %v3215
        %3272 = vst [vmem:[%s235 + $0x18] sm:$0xff] %v3218
        %3273 = vst [vmem:[%s235 + $0x20] sm:$0xff] %v3223
        %3274 = vst [vmem:[%s235 + $0x28] sm:$0xff] %v3226
        %3275 = vst [vmem:[%s235 + $0x30] sm:$0xff] %v3231
        %3276 = vst [vmem:[%s235 + $0x38] sm:$0xff] %v3234
        %3277 = vst [vmem:[%s235 + $0x40] sm:$0xff] %v3239
        %3278 = vst [vmem:[%s235 + $0x48] sm:$0xff] %v3242
        %3279 = vst [vmem:[%s235 + $0x50] sm:$0xff] %v3247
        %3280 = vst [vmem:[%s235 + $0x58] sm:$0xff] %v3250
        %3281 = vst [vmem:[%s235 + $0x60] sm:$0xff] %v3255
        %3282 = vst [vmem:[%s235 + $0x68] sm:$0xff] %v3258
        %3283 = vst [vmem:[%s235 + $0x70] sm:$0xff] %v3263
        %3284 = vst [vmem:[%s235 + $0x78] sm:$0xff] %v3266
        %s3285 = sand.u32 %s138, 1
        %s3286 = scalar_lea.sflag [#allocation4], %s3285
        %s3287 = sand.u32 %s138, 1
        %s3288 = smul.addr %s3287, 128
        %s3289 = scalar_lea.vmem [#allocation5], %s3288
        // Predicated region
        $region45: #{tpu_custom_call.1} parent=39 // pred_check
          %p3290 = pneg %p148
        $region46: #{tpu_custom_call.1} parent=39 // pred_check_branch
          %3292 = sbr.rel (%p3290) target = $region48
        $region47: #{tpu_custom_call.1} parent=39 // pred_region
          %s3293 = smul.u32 16, %s20
          %s3295 = ssub.s32 2048, 2048
          %3296 = vsyncadd %s3286, %s3295
          %s3297 = smul.addr %s3293, 128
          %s3298 = scalar_lea.hbm %s5, %s3297
          %s3299 = sshll.u32 %s3289, 4
          %s3300 = int_to_ptr.vmem [resolvable:$true] %s3299
          %3305 = dma.vmem_to_hbm [thread:$0]  %s3300, 2048, %s3298, %s3286, 128, 128, 8
        $region48: #{tpu_custom_call.1} parent=39 // pred_fallthru
          _
      $region40: #{tpu_custom_call.1} parent=5 // pred_fallthru
        _
      %p3306 = scmp.le.s32.totalorder 2, %s15
      // Predicated region
      $region49: #{tpu_custom_call.1} parent=5 // pred_check
        %p3307 = pneg %p3306
      $region50: #{tpu_custom_call.1} parent=5 // pred_check_branch
        %3309 = sbr.rel (%p3307) target = $region52
      $region51: #{tpu_custom_call.1} parent=5 // pred_region
        %s3310 = ssub.s32 %s15, 2
        // Predicated region
        $region53: #{tpu_custom_call.1} parent=51 // pred_check
          %p3311 = pneg %p154
        $region54: #{tpu_custom_call.1} parent=51 // pred_check_branch
          %3313 = sbr.rel (%p3311) target = $region56
        $region55: #{tpu_custom_call.1} parent=51 // pred_region
          %s3314 = sand.u32 %s139, 1
          %s3315 = scalar_lea.sflag [#allocation4], %s3314
          %s3316 = sand.u32 %s139, 1
          %s3317 = smul.addr %s3316, 128
          %s3318 = scalar_lea.vmem [#allocation5], %s3317
          %3319 = dma.done %s3315, 2048
        $region56: #{tpu_custom_call.1} parent=51 // pred_fallthru
          _
      $region52: #{tpu_custom_call.1} parent=5 // pred_fallthru
        _
    $region6: #{tpu_custom_call.1} parent=1 // loop_footer
      %s19 = sadd.s32 1, %s15
    $region7: #{tpu_custom_call.1} parent=1 // loop_footer_branch
      %14 = sbr.rel target = $region3
    $region8: #{tpu_custom_call.1} parent=1 // loop_exit
      _
    %3320 = vsyncpa [#allocation3], 1
    %s3321 = scalar_lea.sflag [#allocation3], 1
    %3322 = vsyncpa %s3321, 1
    %3323 = vsyncpa [#allocation4], 1
    %s3324 = scalar_lea.sflag [#allocation4], 1
    %3325 = vsyncpa %s3324, 1

</llo_original>
